<compile_context>
chip_gen: v7x
topology: tpu7x:2x2x1
jax: 0.10.0
libtpu: 0.0.40
codegen_flags: <defaults>
</compile_context>

<pallas_src>
import math

import numpy as np
import jax
import jax.numpy as jnp
from jax import lax
from jax.experimental import pallas as pl
from jax.experimental.pallas import tpu as pltpu


# ---------------------------------------------------------------------------
# Host-side parameter preprocessing (input independent, mirrors torch buffers)
# ---------------------------------------------------------------------------
def _relative_coords_table(window_size, pretrained_window_size=(0, 0)):
    Wh, Ww = window_size
    rh = np.arange(-(Wh - 1), Wh, dtype=np.float32)
    rw = np.arange(-(Ww - 1), Ww, dtype=np.float32)
    table = np.stack(np.meshgrid(rh, rw, indexing="ij"), axis=-1)[None]  # (1,2Wh-1,2Ww-1,2)
    if pretrained_window_size[0] > 0:
        table[..., 0] /= pretrained_window_size[0] - 1
        table[..., 1] /= pretrained_window_size[1] - 1
    else:
        table[..., 0] /= Wh - 1
        table[..., 1] /= Ww - 1
    table *= 8.0
    table = np.sign(table) * np.log2(np.abs(table) + 1.0) / np.log2(8.0)
    return jnp.asarray(table, dtype=jnp.float32)


def _relative_position_index(window_size):
    Wh, Ww = window_size
    coords = np.stack(np.meshgrid(np.arange(Wh), np.arange(Ww), indexing="ij"))
    coords_flatten = coords.reshape(2, -1)
    rel = coords_flatten[:, :, None] - coords_flatten[:, None, :]
    rel = rel.transpose(1, 2, 0).astype(np.int64)
    rel[..., 0] += Wh - 1
    rel[..., 1] += Ww - 1
    rel[..., 0] *= 2 * Ww - 1
    return jnp.asarray(rel.sum(-1), dtype=jnp.int32)  # (N, N)


def compute_relative_position_bias(params, window_size, num_heads,
                                   pretrained_window_size=(0, 0)):
    """cpb_mlp(coords_table) -> gather -> 16*sigmoid.  Returns (nH, N, N) f32."""
    high = jax.lax.Precision.HIGHEST
    table = _relative_coords_table(window_size, pretrained_window_size).reshape(-1, 2)
    h = jnp.maximum(
        jnp.dot(table, params["w_cpb1"], precision=high) + params["b_cpb1"], 0.0)
    tab = jnp.dot(h, params["w_cpb2"], precision=high)          # (T, nH)
    idx = _relative_position_index(window_size).reshape(-1)
    N = window_size[0] * window_size[1]
    bias = tab[idx].reshape(N, N, num_heads)
    bias = jnp.transpose(bias, (2, 0, 1))
    return 16.0 * jax.nn.sigmoid(bias)


# ---------------------------------------------------------------------------
# Pallas kernel
# ---------------------------------------------------------------------------
def _make_window_attention_kernel(num_heads, head_dim, n_win_mask, has_mask,
                                  compute_dtype):
    def kernel(x_ref, wqkv_ref, qkvb_ref, scale_ref, bias_ref, wproj_ref,
               bproj_ref, *rest):
        if has_mask:
            mask_ref, o_ref, ctx_ref = rest
        else:
            o_ref, ctx_ref = rest

        BW, N, C = x_ref.shape

        # Fused QKV projection: one bf16 MXU matmul with f32 accumulation.
        x2 = x_ref[...].reshape(BW * N, C)                       # bf16
        qkv = jnp.dot(x2, wqkv_ref[...], preferred_element_type=jnp.float32)
        qkv = qkv + qkvb_ref[...]                                # (BW*N, 3C) f32

        if has_mask:
            rep = BW // n_win_mask
            mask_v = mask_ref[...]                               # (nW, N, N) f32, hoisted

        # Static loop over heads; each head's context goes straight to the VMEM
        # scratch so live ranges stay bounded (no concat relayout at the end).
        for h in range(num_heads):
            s0 = h * head_dim
            qh = qkv[:, s0:s0 + head_dim].reshape(BW, N, head_dim)
            kh = qkv[:, C + s0:C + s0 + head_dim].reshape(BW, N, head_dim)
            vh = qkv[:, 2 * C + s0:2 * C + s0 + head_dim].reshape(BW, N, head_dim)

            # Cosine attention; clamped per-head logit scale folded into the
            # normalized q.  rsqrt / exp / approx-reciprocal run on the EUP.
            qn = qh * lax.rsqrt(
                jnp.maximum(jnp.sum(qh * qh, axis=-1, keepdims=True), 1e-24))
            qn = qn * scale_ref[:, s0:s0 + head_dim]
            kn = kh * lax.rsqrt(
                jnp.maximum(jnp.sum(kh * kh, axis=-1, keepdims=True), 1e-24))
            attn = jnp.einsum("bnd,bmd->bnm", qn, kn,
                              preferred_element_type=jnp.float32)

            bias_h = bias_ref[h]                                 # (N, N)
            if has_mask:
                # Fold rel-pos bias + shift mask into one additive (nW,N,N) term.
                # Block start is a multiple of nW, so window id of row b is b%nW.
                bm = bias_h + mask_v                             # (nW, N, N)
                attn = (attn.reshape(rep, n_win_mask, N, N) + bm).reshape(BW, N, N)
            else:
                attn = attn + bias_h

            # softmax (attn_drop p=0.0 -> identity)
            attn = attn - jnp.max(attn, axis=-1, keepdims=True)
            p = jnp.exp(attn)
            p = p * pl.reciprocal(jnp.sum(p, axis=-1, keepdims=True), approx=True)

            ctx_h = jnp.einsum("bnm,bmd->bnd",
                               p.astype(compute_dtype), vh.astype(compute_dtype),
                               preferred_element_type=jnp.float32)
            ctx_ref[:, s0:s0 + head_dim] = (
                ctx_h.reshape(BW * N, head_dim).astype(ctx_ref.dtype))

        # Single lane-dense output projection, contraction over full C.
        out = jnp.dot(ctx_ref[...], wproj_ref[...],
                      preferred_element_type=jnp.float32)
        out = out + bproj_ref[...]                               # proj_drop p=0.0
        o_ref[...] = out.reshape(BW, N, C).astype(o_ref.dtype)

    return kernel


# ---------------------------------------------------------------------------
# Wrapper
# ---------------------------------------------------------------------------
def _pick_vmem_limit():
    """128 MiB parts (v5e/v6e) get a bigger scoped-VMEM budget than v7x."""
    try:
        kind = jax.devices()[0].device_kind.lower()
    except Exception:
        kind = ""
    if "v5" in kind or "v6" in kind:
        return 96 * 1024 * 1024
    return 40 * 1024 * 1024          # v7x-class (64 MiB/TC) or unknown: headroom


def window_attention_forward(x, params, mask=None, *, num_heads, window_size,
                             pretrained_window_size=(0, 0), block_windows=64,
                             compute_dtype=jnp.bfloat16, vmem_limit_bytes=None):
    """x: (B_, N, C) with N = Wh*Ww; mask: (nW, N, N) or None. Returns (B_, N, C)."""
    B_, N, C = x.shape
    assert C % num_heads == 0
    assert N == window_size[0] * window_size[1]
    hd = C // num_heads
    if vmem_limit_bytes is None:
        vmem_limit_bytes = _pick_vmem_limit()

    # --- input-independent preprocessing (buffers / parameter-only math) ---
    rel_bias = compute_relative_position_bias(
        params, window_size, num_heads, pretrained_window_size)       # (nH, N, N)
    scale = jnp.exp(jnp.minimum(params["logit_scale"].reshape(num_heads),
                                math.log(1.0 / 0.01)))                 # (nH,)
    scale_row = jnp.repeat(scale, hd).reshape(1, C).astype(jnp.float32)

    wqkv = params["wqkv"].astype(compute_dtype)                        # (C, 3C) fused
    wproj = params["wproj"].astype(compute_dtype)                      # (C, C)
    qkvb = jnp.concatenate([params["q_bias"],
                            jnp.zeros_like(params["v_bias"]),
                            params["v_bias"]]).reshape(1, 3 * C).astype(jnp.float32)
    bproj = params["bproj"].reshape(1, C).astype(jnp.float32)

    has_mask = mask is not None
    nW = int(mask.shape[0]) if has_mask else 1
    if has_mask:
        assert B_ % nW == 0, "B_ must be a multiple of the number of windows"
        mask_f = mask.astype(jnp.float32)      # stays (nW,N,N): never tiled to B_

    # --- block-of-windows tiling ---
    BW = max(1, min(int(block_windows), B_))
    if has_mask:
        BW = max(nW, (BW // nW) * nW)          # block starts on a window boundary
    if -(-B_ // BW) == 1 and B_ > 1:
        half = -(-B_ // 2)
        if has_mask:
            half = max(nW, -(-half // nW) * nW)
        if half < BW:
            BW = half                          # >=2 grid steps: v7x dual-TC + pipelining
    n_blocks = -(-B_ // BW)
    B_pad = n_blocks * BW

    x_c = x.astype(compute_dtype)
    if B_pad != B_:
        x_c = jnp.pad(x_c, ((0, B_pad - B_), (0, 0), (0, 0)))

    kernel = _make_window_attention_kernel(num_heads, hd, nW, has_mask, compute_dtype)

    const2 = lambda i: (0, 0)
    const3 = lambda i: (0, 0, 0)
    in_specs = [
        pl.BlockSpec((BW, N, C), lambda i: (i, 0, 0)),        # x block (streamed)
        pl.BlockSpec((C, 3 * C), const2),                     # fused Wqkv (resident)
        pl.BlockSpec((1, 3 * C), const2),                     # [q_bias, 0, v_bias]
        pl.BlockSpec((1, C), const2),                         # per-head logit scale
        pl.BlockSpec((num_heads, N, N), const3),              # rel-pos bias
        pl.BlockSpec((C, C), const2),                         # Wproj
        pl.BlockSpec((1, C), const2),                         # proj bias
    ]
    args = [x_c, wqkv, qkvb, scale_row, rel_bias, wproj, bproj]
    if has_mask:
        in_specs.append(pl.BlockSpec((nW, N, N), const3))     # shift mask (resident)
        args.append(mask_f)

    out = pl.pallas_call(
        kernel,
        out_shape=jax.ShapeDtypeStruct((B_pad, N, C), x.dtype),
        grid_spec=pltpu.PrefetchScalarGridSpec(
            num_scalar_prefetch=0,
            grid=(n_blocks,),
            in_specs=in_specs,
            out_specs=pl.BlockSpec((BW, N, C), lambda i: (i, 0, 0)),
            scratch_shapes=[pltpu.VMEM((BW * N, C), compute_dtype)],   # per-head ctx
        ),
        compiler_params=pltpu.CompilerParams(
            dimension_semantics=("parallel",),
            vmem_limit_bytes=vmem_limit_bytes,
        ),
    )(*args)

    return out[:B_]


# ---------------------------------------------------------------------------
# Plain-JAX reference mirroring the PyTorch forward exactly (f32, HIGHEST)
# ---------------------------------------------------------------------------
def window_attention_reference(x, params, mask, *, num_heads, window_size,
                               pretrained_window_size=(0, 0)):
    high = jax.lax.Precision.HIGHEST
    B_, N, C = x.shape
    hd = C // num_heads
    qkv_bias = jnp.concatenate([params["q_bias"],
                                jnp.zeros_like(params["v_bias"]),
                                params["v_bias"]])
    qkv = jnp.einsum("bnc,ck->bnk", x, params["wqkv"], precision=high) + qkv_bias
    qkv = qkv.reshape(B_, N, 3, num_heads, hd).transpose(2, 0, 3, 1, 4)
    q, k, v = qkv[0], qkv[1], qkv[2]
    qn = q / jnp.maximum(jnp.sqrt(jnp.sum(q * q, -1, keepdims=True)), 1e-12)
    kn = k / jnp.maximum(jnp.sqrt(jnp.sum(k * k, -1, keepdims=True)), 1e-12)
    attn = jnp.einsum("bhnd,bhmd->bhnm", qn, kn, precision=high)
    logit_scale = jnp.exp(jnp.minimum(params["logit_scale"], math.log(1.0 / 0.01)))
    attn = attn * logit_scale[None]
    rel_bias = compute_relative_position_bias(
        params, window_size, num_heads, pretrained_window_size)
    attn = attn + rel_bias[None]
    if mask is not None:
        nW = mask.shape[0]
        attn = attn.reshape(B_ // nW, nW, num_heads, N, N) + mask[None, :, None]
        attn = attn.reshape(-1, num_heads, N, N)
    attn = jax.nn.softmax(attn, axis=-1)
    out = jnp.einsum("bhnm,bhmd->bhnd", attn, v, precision=high)
    out = out.transpose(0, 2, 1, 3).reshape(B_, N, C)
    out = jnp.einsum("bnc,cd->bnd", out, params["wproj"], precision=high)
    return out + params["bproj"]


# ---------------------------------------------------------------------------
# Deterministic parameter init (weights stored pre-transposed, [in, out])
# ---------------------------------------------------------------------------
def init_window_attention_params(key, dim, num_heads, dtype=jnp.float32):
    ks = jax.random.split(key, 8)

    def uni(k, shape, fan_in):
        b = 1.0 / math.sqrt(fan_in)
        return jax.random.uniform(k, shape, dtype, minval=-b, maxval=b)

    # NOTE: PyTorch inits q_bias/v_bias to zero; small random values here so the
    # bias-add path is actually exercised by the numeric check.
    return dict(
        wqkv=uni(ks[0], (dim, 3 * dim), dim),
        q_bias=0.02 * jax.random.normal(ks[1], (dim,), dtype),
        v_bias=0.02 * jax.random.normal(ks[2], (dim,), dtype),
        wproj=uni(ks[3], (dim, dim), dim),
        bproj=uni(ks[4], (dim,), dim),
        w_cpb1=uni(ks[5], (2, 512), 2),
        b_cpb1=uni(ks[6], (512,), 2),
        w_cpb2=uni(ks[7], (512, num_heads), 512),
        logit_scale=jnp.log(10.0 * jnp.ones((num_heads, 1, 1), dtype)),
    )


# TODO(synk): attn_drop/proj_drop > 0 (training-mode dropout) not implemented;
# module defaults are 0.0, which is the identity in this forward pass.

if __name__ == "__main__":
    dim, num_heads = 64, 2
    window_size = (8, 8)
    N = window_size[0] * window_size[1]
    batch, nW = 2, 2
    B_ = batch * nW                          # num_windows * batch

    key = jax.random.PRNGKey(0)
    kx, kp = jax.random.split(key)
    x = jax.random.normal(kx, (B_, N, dim), dtype=jnp.float32)
    params = init_window_attention_params(kp, dim, num_heads)

    # --- no-mask (regular window) path ---
    out = window_attention_forward(x, params, mask=None,
                                   num_heads=num_heads, window_size=window_size)
    out = jax.block_until_ready(out)
    ref = window_attention_reference(x, params, None,
                                     num_heads=num_heads, window_size=window_size)
    assert out.shape == (B_, N, dim)
    assert jnp.allclose(out, ref, atol=2.5e-2, rtol=2.5e-2), \
        "mismatch vs reference (no mask)"

    # --- shifted-window (additive 0 / -100 mask) path ---
    row = jnp.arange(N) // (N // 2)
    block_mask = jnp.where(row[:, None] == row[None, :], 0.0, -100.0).astype(jnp.float32)
    mask = jnp.stack([jnp.zeros((N, N), jnp.float32), block_mask])   # (nW, N, N)
    out_m = window_attention_forward(x, params, mask=mask,
                                     num_heads=num_heads, window_size=window_size)
    out_m = jax.block_until_ready(out_m)
    ref_m = window_attention_reference(x, params, mask,
                                       num_heads=num_heads, window_size=window_size)
    assert jnp.allclose(out_m, ref_m, atol=2.5e-2, rtol=2.5e-2), \
        "mismatch vs reference (mask)"

    print("KERNEL_OK")
</pallas_src>

<mosaic_0001>
module attributes {stable_mosaic.version = 11 : i64} {
  func.func @kernel(%arg0: i32, %arg1: memref<2x64x64xbf16, #tpu.memory_space<vmem>>, %arg2: memref<64x192xbf16, #tpu.memory_space<vmem>>, %arg3: memref<1x192xf32, #tpu.memory_space<vmem>>, %arg4: memref<1x64xf32, #tpu.memory_space<vmem>>, %arg5: memref<2x64x64xf32, #tpu.memory_space<vmem>>, %arg6: memref<64x64xbf16, #tpu.memory_space<vmem>>, %arg7: memref<1x64xf32, #tpu.memory_space<vmem>>, %arg8: memref<2x64x64xf32, #tpu.memory_space<vmem>>, %arg9: memref<128x64xbf16, #tpu.memory_space<vmem>>) attributes {dimension_semantics = [#tpu.dimension_semantics<parallel>], iteration_bounds = array<i64: 2>, scalar_prefetch = 0 : i64, scratch_operands = 1 : i64, tpu.core_type = #tpu.core_type<tc>, window_params = [{transform_indices = @transform_0, window_bounds = array<i64: 2, 64, 64>}, {pipeline_mode = #tpu.pipeline_mode<synchronous>, transform_indices = @transform_1, window_bounds = array<i64: 64, 192>}, {pipeline_mode = #tpu.pipeline_mode<synchronous>, transform_indices = @transform_2, window_bounds = array<i64: 1, 192>}, {pipeline_mode = #tpu.pipeline_mode<synchronous>, transform_indices = @transform_3, window_bounds = array<i64: 1, 64>}, {pipeline_mode = #tpu.pipeline_mode<synchronous>, transform_indices = @transform_4, window_bounds = array<i64: 2, 64, 64>}, {pipeline_mode = #tpu.pipeline_mode<synchronous>, transform_indices = @transform_5, window_bounds = array<i64: 64, 64>}, {pipeline_mode = #tpu.pipeline_mode<synchronous>, transform_indices = @transform_6, window_bounds = array<i64: 1, 64>}, {transform_indices = @transform_7, window_bounds = array<i64: 2, 64, 64>}]} {
    %c0 = arith.constant 0 : index
    %c0_0 = arith.constant 0 : index
    %c0_1 = arith.constant 0 : index
    %0 = vector.load %arg1[%c0, %c0_0, %c0_1] : memref<2x64x64xbf16, #tpu.memory_space<vmem>>, vector<2x64x64xbf16>
    %1 = vector.shape_cast %0 : vector<2x64x64xbf16> to vector<128x64xbf16>
    %c0_2 = arith.constant 0 : index
    %c0_3 = arith.constant 0 : index
    %2 = vector.load %arg2[%c0_2, %c0_3] : memref<64x192xbf16, #tpu.memory_space<vmem>>, vector<64x192xbf16>
    %cst = arith.constant dense<0.000000e+00> : vector<128x192xf32>
    %3 = tpu.matmul %1, %2, %cst {dimension_numbers = #tpu.dot_dimension_numbers<[1], [0], [0], [1], [0, 0, 1, 1], [], []>} : vector<128x64xbf16>, vector<64x192xbf16>, vector<128x192xf32> -> vector<128x192xf32>
    %c0_4 = arith.constant 0 : index
    %c0_5 = arith.constant 0 : index
    %4 = vector.load %arg3[%c0_4, %c0_5] : memref<1x192xf32, #tpu.memory_space<vmem>>, vector<1x192xf32>
    %5 = vector.broadcast %4 : vector<1x192xf32> to vector<128x192xf32>
    %6 = arith.addf %3, %5 : vector<128x192xf32>
    %7 = vector.extract_strided_slice %6 {offsets = [0, 0], sizes = [128, 32], strides = [1, 1]} : vector<128x192xf32> to vector<128x32xf32>
    %8 = vector.shape_cast %7 : vector<128x32xf32> to vector<2x64x32xf32>
    %9 = vector.extract_strided_slice %6 {offsets = [0, 64], sizes = [128, 32], strides = [1, 1]} : vector<128x192xf32> to vector<128x32xf32>
    %10 = vector.shape_cast %9 : vector<128x32xf32> to vector<2x64x32xf32>
    %11 = vector.extract_strided_slice %6 {offsets = [0, 128], sizes = [128, 32], strides = [1, 1]} : vector<128x192xf32> to vector<128x32xf32>
    %12 = vector.shape_cast %11 : vector<128x32xf32> to vector<2x64x32xf32>
    %13 = arith.mulf %8, %8 : vector<2x64x32xf32>
    %cst_6 = arith.constant dense<0.000000e+00> : vector<2x64xf32>
    %14 = vector.multi_reduction <add>, %13, %cst_6 [2] : vector<2x64x32xf32> to vector<2x64xf32>
    %15 = vector.shape_cast %14 : vector<2x64xf32> to vector<2x64x1xf32>
    %cst_7 = arith.constant 1.000000e-24 : f32
    %16 = vector.broadcast %cst_7 : f32 to vector<2x64x1xf32>
    %17 = arith.maximumf %15, %16 : vector<2x64x1xf32>
    %18 = math.rsqrt %17 : vector<2x64x1xf32>
    %19 = vector.broadcast %18 : vector<2x64x1xf32> to vector<2x64x32xf32>
    %20 = arith.mulf %8, %19 : vector<2x64x32xf32>
    %c0_8 = arith.constant 0 : index
    %c0_9 = arith.constant 0 : index
    %21 = vector.load %arg4[%c0_8, %c0_9] : memref<1x64xf32, #tpu.memory_space<vmem>>, vector<1x32xf32>
    %22 = vector.shape_cast %21 : vector<1x32xf32> to vector<1x1x32xf32>
    %23 = vector.broadcast %22 : vector<1x1x32xf32> to vector<2x64x32xf32>
    %24 = arith.mulf %20, %23 : vector<2x64x32xf32>
    %25 = arith.mulf %10, %10 : vector<2x64x32xf32>
    %cst_10 = arith.constant dense<0.000000e+00> : vector<2x64xf32>
    %26 = vector.multi_reduction <add>, %25, %cst_10 [2] : vector<2x64x32xf32> to vector<2x64xf32>
    %27 = vector.shape_cast %26 : vector<2x64xf32> to vector<2x64x1xf32>
    %cst_11 = arith.constant 1.000000e-24 : f32
    %28 = vector.broadcast %cst_11 : f32 to vector<2x64x1xf32>
    %29 = arith.maximumf %27, %28 : vector<2x64x1xf32>
    %30 = math.rsqrt %29 : vector<2x64x1xf32>
    %31 = vector.broadcast %30 : vector<2x64x1xf32> to vector<2x64x32xf32>
    %32 = arith.mulf %10, %31 : vector<2x64x32xf32>
    "tpu.trace_start"() <{level = 10 : i32, message = "bnd,bmd->bnm"}> : () -> ()
    %cst_12 = arith.constant dense<0.000000e+00> : vector<2x64x64xf32>
    %33 = tpu.matmul %24, %32, %cst_12 {dimension_numbers = #tpu.dot_dimension_numbers<[2], [2], [1], [1], [0, 0, 0, 1, 1, 1], [0], [0]>} : vector<2x64x32xf32>, vector<2x64x32xf32>, vector<2x64x64xf32> -> vector<2x64x64xf32>
    "tpu.trace_stop"() : () -> ()
    %c0_13 = arith.constant 0 : index
    %c0_14 = arith.constant 0 : index
    %c0_15 = arith.constant 0 : index
    %34 = vector.load %arg5[%c0_13, %c0_14, %c0_15] : memref<2x64x64xf32, #tpu.memory_space<vmem>>, vector<1x64x64xf32>
    %35 = vector.shape_cast %34 : vector<1x64x64xf32> to vector<64x64xf32>
    %36 = vector.shape_cast %35 : vector<64x64xf32> to vector<1x64x64xf32>
    %37 = vector.broadcast %36 : vector<1x64x64xf32> to vector<2x64x64xf32>
    %38 = arith.addf %33, %37 : vector<2x64x64xf32>
    %cst_16 = arith.constant dense<0xFF800000> : vector<2x64xf32>
    %39 = vector.multi_reduction <maximumf>, %38, %cst_16 [2] : vector<2x64x64xf32> to vector<2x64xf32>
    %40 = vector.shape_cast %39 : vector<2x64xf32> to vector<2x64x1xf32>
    %41 = vector.broadcast %40 : vector<2x64x1xf32> to vector<2x64x64xf32>
    %42 = arith.subf %38, %41 : vector<2x64x64xf32>
    %43 = math.exp %42 : vector<2x64x64xf32>
    %cst_17 = arith.constant dense<0.000000e+00> : vector<2x64xf32>
    %44 = vector.multi_reduction <add>, %43, %cst_17 [2] : vector<2x64x64xf32> to vector<2x64xf32>
    %45 = vector.shape_cast %44 : vector<2x64xf32> to vector<2x64x1xf32>
    %46 = tpu.reciprocal %45 {approx = true} : vector<2x64x1xf32> -> vector<2x64x1xf32>
    %47 = vector.broadcast %46 : vector<2x64x1xf32> to vector<2x64x64xf32>
    %48 = arith.mulf %43, %47 : vector<2x64x64xf32>
    %49 = arith.truncf %48 : vector<2x64x64xf32> to vector<2x64x64xbf16>
    %50 = arith.truncf %12 : vector<2x64x32xf32> to vector<2x64x32xbf16>
    "tpu.trace_start"() <{level = 10 : i32, message = "bnm,bmd->bnd"}> : () -> ()
    %cst_18 = arith.constant dense<0.000000e+00> : vector<2x64x32xf32>
    %51 = tpu.matmul %49, %50, %cst_18 {dimension_numbers = #tpu.dot_dimension_numbers<[2], [1], [1], [2], [0, 0, 0, 1, 1, 2], [0], [0]>} : vector<2x64x64xbf16>, vector<2x64x32xbf16>, vector<2x64x32xf32> -> vector<2x64x32xf32>
    "tpu.trace_stop"() : () -> ()
    %52 = vector.shape_cast %51 : vector<2x64x32xf32> to vector<128x32xf32>
    %53 = arith.truncf %52 : vector<128x32xf32> to vector<128x32xbf16>
    %c0_19 = arith.constant 0 : index
    %c0_20 = arith.constant 0 : index
    %54 = vector.load %arg9[%c0_19, %c0_20] : memref<128x64xbf16, #tpu.memory_space<vmem>>, vector<128x32xbf16>
    tpu.vector_store %arg9[%c0_19, %c0_20], %53 {strides = array<i32>} : memref<128x64xbf16, #tpu.memory_space<vmem>>, vector<128x32xbf16>,
    %55 = vector.extract_strided_slice %6 {offsets = [0, 32], sizes = [128, 32], strides = [1, 1]} : vector<128x192xf32> to vector<128x32xf32>
    %56 = vector.shape_cast %55 : vector<128x32xf32> to vector<2x64x32xf32>
    %57 = vector.extract_strided_slice %6 {offsets = [0, 96], sizes = [128, 32], strides = [1, 1]} : vector<128x192xf32> to vector<128x32xf32>
    %58 = vector.shape_cast %57 : vector<128x32xf32> to vector<2x64x32xf32>
    %59 = vector.extract_strided_slice %6 {offsets = [0, 160], sizes = [128, 32], strides = [1, 1]} : vector<128x192xf32> to vector<128x32xf32>
    %60 = vector.shape_cast %59 : vector<128x32xf32> to vector<2x64x32xf32>
    %61 = arith.mulf %56, %56 : vector<2x64x32xf32>
    %cst_21 = arith.constant dense<0.000000e+00> : vector<2x64xf32>
    %62 = vector.multi_reduction <add>, %61, %cst_21 [2] : vector<2x64x32xf32> to vector<2x64xf32>
    %63 = vector.shape_cast %62 : vector<2x64xf32> to vector<2x64x1xf32>
    %cst_22 = arith.constant 1.000000e-24 : f32
    %64 = vector.broadcast %cst_22 : f32 to vector<2x64x1xf32>
    %65 = arith.maximumf %63, %64 : vector<2x64x1xf32>
    %66 = math.rsqrt %65 : vector<2x64x1xf32>
    %67 = vector.broadcast %66 : vector<2x64x1xf32> to vector<2x64x32xf32>
    %68 = arith.mulf %56, %67 : vector<2x64x32xf32>
    %c0_23 = arith.constant 0 : index
    %c32 = arith.constant 32 : index
    %69 = vector.load %arg4[%c0_23, %c32] : memref<1x64xf32, #tpu.memory_space<vmem>>, vector<1x32xf32>
    %70 = vector.shape_cast %69 : vector<1x32xf32> to vector<1x1x32xf32>
    %71 = vector.broadcast %70 : vector<1x1x32xf32> to vector<2x64x32xf32>
    %72 = arith.mulf %68, %71 : vector<2x64x32xf32>
    %73 = arith.mulf %58, %58 : vector<2x64x32xf32>
    %cst_24 = arith.constant dense<0.000000e+00> : vector<2x64xf32>
    %74 = vector.multi_reduction <add>, %73, %cst_24 [2] : vector<2x64x32xf32> to vector<2x64xf32>
    %75 = vector.shape_cast %74 : vector<2x64xf32> to vector<2x64x1xf32>
    %cst_25 = arith.constant 1.000000e-24 : f32
    %76 = vector.broadcast %cst_25 : f32 to vector<2x64x1xf32>
    %77 = arith.maximumf %75, %76 : vector<2x64x1xf32>
    %78 = math.rsqrt %77 : vector<2x64x1xf32>
    %79 = vector.broadcast %78 : vector<2x64x1xf32> to vector<2x64x32xf32>
    %80 = arith.mulf %58, %79 : vector<2x64x32xf32>
    "tpu.trace_start"() <{level = 10 : i32, message = "bnd,bmd->bnm"}> : () -> ()
    %cst_26 = arith.constant dense<0.000000e+00> : vector<2x64x64xf32>
    %81 = tpu.matmul %72, %80, %cst_26 {dimension_numbers = #tpu.dot_dimension_numbers<[2], [2], [1], [1], [0, 0, 0, 1, 1, 1], [0], [0]>} : vector<2x64x32xf32>, vector<2x64x32xf32>, vector<2x64x64xf32> -> vector<2x64x64xf32>
    "tpu.trace_stop"() : () -> ()
    %c1 = arith.constant 1 : index
    %c0_27 = arith.constant 0 : index
    %c0_28 = arith.constant 0 : index
    %82 = vector.load %arg5[%c1, %c0_27, %c0_28] : memref<2x64x64xf32, #tpu.memory_space<vmem>>, vector<1x64x64xf32>
    %83 = vector.shape_cast %82 : vector<1x64x64xf32> to vector<64x64xf32>
    %84 = vector.shape_cast %83 : vector<64x64xf32> to vector<1x64x64xf32>
    %85 = vector.broadcast %84 : vector<1x64x64xf32> to vector<2x64x64xf32>
    %86 = arith.addf %81, %85 : vector<2x64x64xf32>
    %cst_29 = arith.constant dense<0xFF800000> : vector<2x64xf32>
    %87 = vector.multi_reduction <maximumf>, %86, %cst_29 [2] : vector<2x64x64xf32> to vector<2x64xf32>
    %88 = vector.shape_cast %87 : vector<2x64xf32> to vector<2x64x1xf32>
    %89 = vector.broadcast %88 : vector<2x64x1xf32> to vector<2x64x64xf32>
    %90 = arith.subf %86, %89 : vector<2x64x64xf32>
    %91 = math.exp %90 : vector<2x64x64xf32>
    %cst_30 = arith.constant dense<0.000000e+00> : vector<2x64xf32>
    %92 = vector.multi_reduction <add>, %91, %cst_30 [2] : vector<2x64x64xf32> to vector<2x64xf32>
    %93 = vector.shape_cast %92 : vector<2x64xf32> to vector<2x64x1xf32>
    %94 = tpu.reciprocal %93 {approx = true} : vector<2x64x1xf32> -> vector<2x64x1xf32>
    %95 = vector.broadcast %94 : vector<2x64x1xf32> to vector<2x64x64xf32>
    %96 = arith.mulf %91, %95 : vector<2x64x64xf32>
    %97 = arith.truncf %96 : vector<2x64x64xf32> to vector<2x64x64xbf16>
    %98 = arith.truncf %60 : vector<2x64x32xf32> to vector<2x64x32xbf16>
    "tpu.trace_start"() <{level = 10 : i32, message = "bnm,bmd->bnd"}> : () -> ()
    %cst_31 = arith.constant dense<0.000000e+00> : vector<2x64x32xf32>
    %99 = tpu.matmul %97, %98, %cst_31 {dimension_numbers = #tpu.dot_dimension_numbers<[2], [1], [1], [2], [0, 0, 0, 1, 1, 2], [0], [0]>} : vector<2x64x64xbf16>, vector<2x64x32xbf16>, vector<2x64x32xf32> -> vector<2x64x32xf32>
    "tpu.trace_stop"() : () -> ()
    %100 = vector.shape_cast %99 : vector<2x64x32xf32> to vector<128x32xf32>
    %101 = arith.truncf %100 : vector<128x32xf32> to vector<128x32xbf16>
    %c0_32 = arith.constant 0 : index
    %c32_33 = arith.constant 32 : index
    %102 = vector.load %arg9[%c0_32, %c32_33] : memref<128x64xbf16, #tpu.memory_space<vmem>>, vector<128x32xbf16>
    tpu.vector_store %arg9[%c0_32, %c32_33], %101 {strides = array<i32>} : memref<128x64xbf16, #tpu.memory_space<vmem>>, vector<128x32xbf16>,
    %c0_34 = arith.constant 0 : index
    %c0_35 = arith.constant 0 : index
    %103 = vector.load %arg9[%c0_34, %c0_35] : memref<128x64xbf16, #tpu.memory_space<vmem>>, vector<128x64xbf16>
    %c0_36 = arith.constant 0 : index
    %c0_37 = arith.constant 0 : index
    %104 = vector.load %arg6[%c0_36, %c0_37] : memref<64x64xbf16, #tpu.memory_space<vmem>>, vector<64x64xbf16>
    %cst_38 = arith.constant dense<0.000000e+00> : vector<128x64xf32>
    %105 = tpu.matmul %103, %104, %cst_38 {dimension_numbers = #tpu.dot_dimension_numbers<[1], [0], [0], [1], [0, 0, 1, 1], [], []>} : vector<128x64xbf16>, vector<64x64xbf16>, vector<128x64xf32> -> vector<128x64xf32>
    %c0_39 = arith.constant 0 : index
    %c0_40 = arith.constant 0 : index
    %106 = vector.load %arg7[%c0_39, %c0_40] : memref<1x64xf32, #tpu.memory_space<vmem>>, vector<1x64xf32>
    %107 = vector.broadcast %106 : vector<1x64xf32> to vector<128x64xf32>
    %108 = arith.addf %105, %107 : vector<128x64xf32>
    %109 = vector.shape_cast %108 : vector<128x64xf32> to vector<2x64x64xf32>
    %c0_41 = arith.constant 0 : index
    %c0_42 = arith.constant 0 : index
    %c0_43 = arith.constant 0 : index
    %110 = vector.load %arg8[%c0_41, %c0_42, %c0_43] : memref<2x64x64xf32, #tpu.memory_space<vmem>>, vector<2x64x64xf32>
    tpu.vector_store %arg8[%c0_41, %c0_42, %c0_43], %109 {strides = array<i32>} : memref<2x64x64xf32, #tpu.memory_space<vmem>>, vector<2x64x64xf32>,
    return
  }
  func.func @transform_0(%arg0: i32) -> (i32, i32, i32) {
    %c0_i32 = arith.constant 0 : i32
    %c0_i32_0 = arith.constant 0 : i32
    %c0_i32_1 = arith.constant 0 : i32
    return %arg0, %c0_i32, %c0_i32_0 : i32, i32, i32
  }
  func.func @transform_1(%arg0: i32) -> (i32, i32) {
    %c0_i32 = arith.constant 0 : i32
    %c0_i32_0 = arith.constant 0 : i32
    %c0_i32_1 = arith.constant 0 : i32
    return %c0_i32, %c0_i32_0 : i32, i32
  }
  func.func @transform_2(%arg0: i32) -> (i32, i32) {
    %c0_i32 = arith.constant 0 : i32
    %c0_i32_0 = arith.constant 0 : i32
    %c0_i32_1 = arith.constant 0 : i32
    return %c0_i32, %c0_i32_0 : i32, i32
  }
  func.func @transform_3(%arg0: i32) -> (i32, i32) {
    %c0_i32 = arith.constant 0 : i32
    %c0_i32_0 = arith.constant 0 : i32
    %c0_i32_1 = arith.constant 0 : i32
    return %c0_i32, %c0_i32_0 : i32, i32
  }
  func.func @transform_4(%arg0: i32) -> (i32, i32, i32) {
    %c0_i32 = arith.constant 0 : i32
    %c0_i32_0 = arith.constant 0 : i32
    %c0_i32_1 = arith.constant 0 : i32
    %c0_i32_2 = arith.constant 0 : i32
    return %c0_i32, %c0_i32_0, %c0_i32_1 : i32, i32, i32
  }
  func.func @transform_5(%arg0: i32) -> (i32, i32) {
    %c0_i32 = arith.constant 0 : i32
    %c0_i32_0 = arith.constant 0 : i32
    %c0_i32_1 = arith.constant 0 : i32
    return %c0_i32, %c0_i32_0 : i32, i32
  }
  func.func @transform_6(%arg0: i32) -> (i32, i32) {
    %c0_i32 = arith.constant 0 : i32
    %c0_i32_0 = arith.constant 0 : i32
    %c0_i32_1 = arith.constant 0 : i32
    return %c0_i32, %c0_i32_0 : i32, i32
  }
  func.func @transform_7(%arg0: i32) -> (i32, i32, i32) {
    %c0_i32 = arith.constant 0 : i32
    %c0_i32_0 = arith.constant 0 : i32
    %c0_i32_1 = arith.constant 0 : i32
    return %arg0, %c0_i32, %c0_i32_0 : i32, i32, i32
  }
}

</mosaic_0001>

<llo_original>
// kernel: tpu_custom_call.1
$region0: #{tpu_custom_call.1}
  #allocation0 [shape = 'u32[]', space=smem, size = 0x4, offset = 0x4, fixed_abs, tag = 'smem constant byte address 0x4 - core index']
  #allocation1 [shape = 'u32[144,128]{1,0:T(1,128)}', space=vmem, size = 0x12000, scoped, tag = 'internal scratch']
  #allocation2 [shape = 'bf16[128,64]{1,0:T(16,128)(2,1)}', space=vmem, size = 0x8000, scoped, tag = 'scratch operand']
  %s0 = inlined_call_operand.hbm [shape: bf16[4,64,64], index: 0, kind: input, shape index: {}]
  %s1 = inlined_call_operand.hbm [shape: bf16[64,192], index: 1, kind: input, shape index: {}]
  %s2 = inlined_call_operand.vmem [shape: f32[1,192], index: 2, kind: input, shape index: {}]
  %s3 = inlined_call_operand.vmem [shape: f32[1,64], index: 3, kind: input, shape index: {}]
  %s4 = inlined_call_operand.hbm [shape: f32[2,64,64], index: 4, kind: input, shape index: {}]
  %s5 = inlined_call_operand.hbm [shape: bf16[64,64], index: 5, kind: input, shape index: {}]
  %s6 = inlined_call_operand.vmem [shape: f32[1,64], index: 6, kind: input, shape index: {}]
  %s7 = inlined_call_operand.hbm [shape: f32[4,64,64], index: 7, kind: output, shape index: {}]
  %s8 = sld [smem:[#allocation0]]
  $region77: #{tpu_custom_call.1} parent=0
    _
  %s10 = ssub.s32 1, %s8
  %s11 = scalar_select 0, %s10, %s8
  $region1: #{tpu_custom_call.1} parent=0
    #allocation3 [shape = 'u8[65536]{0}', space=vmem, size = 0x10000, scoped, tag = 'input window, operand 0']
    #allocation4 [shape = 's32[2]{0}', space=sflag, size = 0x8, scoped, tag = 'scoped memory for tpu_custom_call.1']
    #allocation5 [shape = 's32[2]{0}', space=sflag, size = 0x8, scoped, tag = 'scoped memory for tpu_custom_call.1']
    #allocation6 [shape = 'u8[32768]{0}', space=vmem, size = 0x8000, scoped, tag = 'input window, operand 1, single buffered']
    #allocation7 [shape = 's32[1]{0}', space=sflag, size = 0x4, scoped, tag = 'scoped memory for tpu_custom_call.1']
    #allocation8 [shape = 'u8[65536]{0}', space=vmem, size = 0x10000, scoped, tag = 'input window, operand 4, single buffered']
    #allocation9 [shape = 'u8[16384]{0}', space=vmem, size = 0x4000, scoped, tag = 'input window, operand 5, single buffered']
    #allocation10 [shape = 's32[1]{0}', space=sflag, size = 0x4, scoped, tag = 'scoped memory for tpu_custom_call.1']
    #allocation11 [shape = 'u8[131072]{0}', space=vmem, size = 0x20000, scoped, tag = 'output window, operand 0']
    %12 = vsyncpa [#allocation4], 0
    %s13 = scalar_lea.sflag [#allocation4], 1
    %14 = vsyncpa %s13, 0
    %15 = vsyncpa [#allocation7], 0
    %16 = vsyncpa [#allocation10], 0
    %17 = vsyncpa [#allocation5], 0
    %s18 = scalar_lea.sflag [#allocation5], 1
    %19 = vsyncpa %s18, 0
    loop: start=0, step=1, limit=4
    $region2: #{tpu_custom_call.1} parent=1 // loop_pre_header
      _
    $region3: #{tpu_custom_call.1} parent=1 // loop_header
      %s21 = sphi 0, %s25
      %p22 = scmp.ge.s32.totalorder %s21, 4
      %s31 = sphi 0, %s33
      %s34 = sphi 0, %s31
      %s35 = sphi 0, %s34
      %s51 = sphi 0, %s35
      %s55 = sphi 0, %s55
      %s57 = sphi 0, %s55
      %s58 = sphi 0, %s57
      %s72 = sphi 0, %s58
      %s76 = sphi 0, %s76
      %s78 = sphi 0, %s76
      %s79 = sphi 0, %s78
      %s93 = sphi 0, %s79
      %s97 = sphi 0, %s97
      %s99 = sphi 0, %s97
      %s100 = sphi 0, %s99
      %s114 = sphi 0, %s100
      %s118 = sphi 0, %s118
      %s120 = sphi 0, %s118
      %s121 = sphi 0, %s120
      %s135 = sphi 0, %s121
      %s139 = sphi 0, %s139
      %s141 = sphi 0, %s139
      %s142 = sphi 0, %s141
      %s156 = sphi 0, %s142
      %s160 = sphi 0, %s160
      %s162 = sphi 0, %s160
      %s163 = sphi 0, %s162
      %s177 = sphi 0, %s163
      %s183 = sphi 0, %s185
      %s186 = sphi 0, %s183
      %s187 = sphi 0, %s186
      %s203 = sphi 0, %s187
    $region4: #{tpu_custom_call.1} parent=1 // loop_header_branch
      %24 = sbr.rel (%p22) target = $region8
    $region5: #{tpu_custom_call.1} parent=1 // loop_body
      %s26 = ssub.s32 %s21, 1
      %s27 = ssub.s32 %s21, 2
      %s28 = sadd.s32 %s21, 1
      %s29 = ssub.s32 %s21, %s28
      %p30 = scmp.eq.s32.totalorder %s29, 0
      %s32 = sadd.s32 %s31, 1
      %s33 = scalar_select %p30, %s31, %s32
      %p36 = pneg %p30
      %p37 = scmp.eq.s32.totalorder %s21, 1
      %p38 = por %p36, %p37
      %p39 = scmp.ne.s32.totalorder %s31, %s34
      %p40 = scmp.eq.s32.totalorder %s21, 0
      %p41 = por %p39, %p40
      %p42 = scmp.ne.s32.totalorder %s31, %s34
      %p43 = scmp.eq.s32.totalorder %s26, 1
      %p44 = por %p42, %p43
      %p45 = scmp.ne.s32.totalorder %s34, %s35
      %p46 = scmp.eq.s32.totalorder %s26, 0
      %p47 = por %p45, %p46
      %p48 = scmp.ne.s32.totalorder %s34, %s35
      %p49 = scmp.eq.s32.totalorder %s27, 1
      %p50 = por %p48, %p49
      %p52 = scmp.ne.s32.totalorder %s35, %s51
      %p53 = scmp.eq.s32.totalorder %s27, 0
      %p54 = por %p52, %p53
      %s56 = sadd.s32 %s55, 1
      %p59 = scmp.eq.s32.totalorder %s21, 1
      %p60 = scmp.ne.s32.totalorder %s55, %s57
      %p61 = scmp.eq.s32.totalorder %s21, 0
      %p62 = por %p60, %p61
      %p63 = scmp.ne.s32.totalorder %s55, %s57
      %p64 = scmp.eq.s32.totalorder %s26, 1
      %p65 = por %p63, %p64
      %p66 = scmp.ne.s32.totalorder %s57, %s58
      %p67 = scmp.eq.s32.totalorder %s26, 0
      %p68 = por %p66, %p67
      %p69 = scmp.ne.s32.totalorder %s57, %s58
      %p70 = scmp.eq.s32.totalorder %s27, 1
      %p71 = por %p69, %p70
      %p73 = scmp.ne.s32.totalorder %s58, %s72
      %p74 = scmp.eq.s32.totalorder %s27, 0
      %p75 = por %p73, %p74
      %s77 = sadd.s32 %s76, 1
      %p80 = scmp.eq.s32.totalorder %s21, 1
      %p81 = scmp.ne.s32.totalorder %s76, %s78
      %p82 = scmp.eq.s32.totalorder %s21, 0
      %p83 = por %p81, %p82
      %p84 = scmp.ne.s32.totalorder %s76, %s78
      %p85 = scmp.eq.s32.totalorder %s26, 1
      %p86 = por %p84, %p85
      %p87 = scmp.ne.s32.totalorder %s78, %s79
      %p88 = scmp.eq.s32.totalorder %s26, 0
      %p89 = por %p87, %p88
      %p90 = scmp.ne.s32.totalorder %s78, %s79
      %p91 = scmp.eq.s32.totalorder %s27, 1
      %p92 = por %p90, %p91
      %p94 = scmp.ne.s32.totalorder %s79, %s93
      %p95 = scmp.eq.s32.totalorder %s27, 0
      %p96 = por %p94, %p95
      %s98 = sadd.s32 %s97, 1
      %p101 = scmp.eq.s32.totalorder %s21, 1
      %p102 = scmp.ne.s32.totalorder %s97, %s99
      %p103 = scmp.eq.s32.totalorder %s21, 0
      %p104 = por %p102, %p103
      %p105 = scmp.ne.s32.totalorder %s97, %s99
      %p106 = scmp.eq.s32.totalorder %s26, 1
      %p107 = por %p105, %p106
      %p108 = scmp.ne.s32.totalorder %s99, %s100
      %p109 = scmp.eq.s32.totalorder %s26, 0
      %p110 = por %p108, %p109
      %p111 = scmp.ne.s32.totalorder %s99, %s100
      %p112 = scmp.eq.s32.totalorder %s27, 1
      %p113 = por %p111, %p112
      %p115 = scmp.ne.s32.totalorder %s100, %s114
      %p116 = scmp.eq.s32.totalorder %s27, 0
      %p117 = por %p115, %p116
      %s119 = sadd.s32 %s118, 1
      %p122 = scmp.eq.s32.totalorder %s21, 1
      %p123 = scmp.ne.s32.totalorder %s118, %s120
      %p124 = scmp.eq.s32.totalorder %s21, 0
      %p125 = por %p123, %p124
      %p126 = scmp.ne.s32.totalorder %s118, %s120
      %p127 = scmp.eq.s32.totalorder %s26, 1
      %p128 = por %p126, %p127
      %p129 = scmp.ne.s32.totalorder %s120, %s121
      %p130 = scmp.eq.s32.totalorder %s26, 0
      %p131 = por %p129, %p130
      %p132 = scmp.ne.s32.totalorder %s120, %s121
      %p133 = scmp.eq.s32.totalorder %s27, 1
      %p134 = por %p132, %p133
      %p136 = scmp.ne.s32.totalorder %s121, %s135
      %p137 = scmp.eq.s32.totalorder %s27, 0
      %p138 = por %p136, %p137
      %s140 = sadd.s32 %s139, 1
      %p143 = scmp.eq.s32.totalorder %s21, 1
      %p144 = scmp.ne.s32.totalorder %s139, %s141
      %p145 = scmp.eq.s32.totalorder %s21, 0
      %p146 = por %p144, %p145
      %p147 = scmp.ne.s32.totalorder %s139, %s141
      %p148 = scmp.eq.s32.totalorder %s26, 1
      %p149 = por %p147, %p148
      %p150 = scmp.ne.s32.totalorder %s141, %s142
      %p151 = scmp.eq.s32.totalorder %s26, 0
      %p152 = por %p150, %p151
      %p153 = scmp.ne.s32.totalorder %s141, %s142
      %p154 = scmp.eq.s32.totalorder %s27, 1
      %p155 = por %p153, %p154
      %p157 = scmp.ne.s32.totalorder %s142, %s156
      %p158 = scmp.eq.s32.totalorder %s27, 0
      %p159 = por %p157, %p158
      %s161 = sadd.s32 %s160, 1
      %p164 = scmp.eq.s32.totalorder %s21, 1
      %p165 = scmp.ne.s32.totalorder %s160, %s162
      %p166 = scmp.eq.s32.totalorder %s21, 0
      %p167 = por %p165, %p166
      %p168 = scmp.ne.s32.totalorder %s160, %s162
      %p169 = scmp.eq.s32.totalorder %s26, 1
      %p170 = por %p168, %p169
      %p171 = scmp.ne.s32.totalorder %s162, %s163
      %p172 = scmp.eq.s32.totalorder %s26, 0
      %p173 = por %p171, %p172
      %p174 = scmp.ne.s32.totalorder %s162, %s163
      %p175 = scmp.eq.s32.totalorder %s27, 1
      %p176 = por %p174, %p175
      %p178 = scmp.ne.s32.totalorder %s163, %s177
      %p179 = scmp.eq.s32.totalorder %s27, 0
      %p180 = por %p178, %p179
      %s181 = ssub.s32 %s21, %s28
      %p182 = scmp.eq.s32.totalorder %s181, 0
      %s184 = sadd.s32 %s183, 1
      %s185 = scalar_select %p182, %s183, %s184
      %p188 = pneg %p182
      %p189 = scmp.eq.s32.totalorder %s21, 1
      %p190 = por %p188, %p189
      %p191 = scmp.ne.s32.totalorder %s183, %s186
      %p192 = scmp.eq.s32.totalorder %s21, 0
      %p193 = por %p191, %p192
      %p194 = scmp.ne.s32.totalorder %s183, %s186
      %p195 = scmp.eq.s32.totalorder %s26, 1
      %p196 = por %p194, %p195
      %p197 = scmp.ne.s32.totalorder %s186, %s187
      %p198 = scmp.eq.s32.totalorder %s26, 0
      %p199 = por %p197, %p198
      %p200 = scmp.ne.s32.totalorder %s186, %s187
      %p201 = scmp.eq.s32.totalorder %s27, 1
      %p202 = por %p200, %p201
      %p204 = scmp.ne.s32.totalorder %s187, %s203
      %p205 = scmp.eq.s32.totalorder %s27, 0
      %p206 = por %p204, %p205
      %p207 = scmp.le.s32.totalorder 1, %s21
      %p208 = scmp.lt.s32.totalorder %s21, 3
      %p209 = pnand %p207, %p208
      %p210 = pneg %p209
      // Predicated region
      $region9: #{tpu_custom_call.1} parent=5 // pred_check
        _
      $region10: #{tpu_custom_call.1} parent=5 // pred_check_branch
        %212 = sbr.rel (%p209) target = $region12
      $region11: #{tpu_custom_call.1} parent=5 // pred_region
        %s213 = ssub.s32 %s21, 1
        // Predicated region
        $region13: #{tpu_custom_call.1} parent=11 // pred_check
          %p214 = pneg %p68
        $region14: #{tpu_custom_call.1} parent=11 // pred_check_branch
          %216 = sbr.rel (%p214) target = $region16
        $region15: #{tpu_custom_call.1} parent=11 // pred_region
          %s218 = ssub.s32 1024, 1024
          %219 = vsyncadd [#allocation7], %s218
          %s220 = sshll.u32 [#allocation6], 4
          %s221 = int_to_ptr.vmem [resolvable:$true] %s220
          %226 = dma.hbm_to_vmem [thread:$0]  %s1, 1024, %s221, [#allocation7], 128, 128, 8
        $region16: #{tpu_custom_call.1} parent=11 // pred_fallthru
          _
        // Predicated region
        $region17: #{tpu_custom_call.1} parent=11 // pred_check
          %p227 = pneg %p89
        $region18: #{tpu_custom_call.1} parent=11 // pred_check_branch
          %229 = sbr.rel (%p227) target = $region20
        $region19: #{tpu_custom_call.1} parent=11 // pred_region
          _
        $region20: #{tpu_custom_call.1} parent=11 // pred_fallthru
          _
        // Predicated region
        $region21: #{tpu_custom_call.1} parent=11 // pred_check
          %p230 = pneg %p110
        $region22: #{tpu_custom_call.1} parent=11 // pred_check_branch
          %232 = sbr.rel (%p230) target = $region24
        $region23: #{tpu_custom_call.1} parent=11 // pred_region
          _
        $region24: #{tpu_custom_call.1} parent=11 // pred_fallthru
          _
        // Predicated region
        $region25: #{tpu_custom_call.1} parent=11 // pred_check
          %p233 = pneg %p131
        $region26: #{tpu_custom_call.1} parent=11 // pred_check_branch
          %235 = sbr.rel (%p233) target = $region28
        $region27: #{tpu_custom_call.1} parent=11 // pred_region
          %s237 = ssub.s32 2048, 2048
          %238 = vsyncadd [#allocation7], %s237
          %s239 = sshll.u32 [#allocation8], 4
          %s240 = int_to_ptr.vmem [resolvable:$true] %s239
          %245 = dma.hbm_to_vmem [thread:$0]  %s4, 2048, %s240, [#allocation7], 128, 128, 8
        $region28: #{tpu_custom_call.1} parent=11 // pred_fallthru
          _
        // Predicated region
        $region29: #{tpu_custom_call.1} parent=11 // pred_check
          %p246 = pneg %p152
        $region30: #{tpu_custom_call.1} parent=11 // pred_check_branch
          %248 = sbr.rel (%p246) target = $region32
        $region31: #{tpu_custom_call.1} parent=11 // pred_region
          %s250 = ssub.s32 512, 512
          %251 = vsyncadd [#allocation10], %s250
          %s252 = sshll.u32 [#allocation9], 4
          %s253 = int_to_ptr.vmem [resolvable:$true] %s252
          %258 = dma.hbm_to_vmem [thread:$0]  %s5, 512, %s253, [#allocation10], 64, 64, 4
        $region32: #{tpu_custom_call.1} parent=11 // pred_fallthru
          _
        // Predicated region
        $region33: #{tpu_custom_call.1} parent=11 // pred_check
          %p259 = pneg %p173
        $region34: #{tpu_custom_call.1} parent=11 // pred_check_branch
          %261 = sbr.rel (%p259) target = $region36
        $region35: #{tpu_custom_call.1} parent=11 // pred_region
          _
        $region36: #{tpu_custom_call.1} parent=11 // pred_fallthru
          _
      $region12: #{tpu_custom_call.1} parent=5 // pred_fallthru
        _
      %p262 = scmp.lt.s32.totalorder %s21, 2
      // Predicated region
      $region37: #{tpu_custom_call.1} parent=5 // pred_check
        %p263 = pneg %p262
      $region38: #{tpu_custom_call.1} parent=5 // pred_check_branch
        %265 = sbr.rel (%p263) target = $region40
      $region39: #{tpu_custom_call.1} parent=5 // pred_region
        // Predicated region
        $region41: #{tpu_custom_call.1} parent=39 // pred_check
          %p266 = pneg %p41
        $region42: #{tpu_custom_call.1} parent=39 // pred_check_branch
          %268 = sbr.rel (%p266) target = $region44
        $region43: #{tpu_custom_call.1} parent=39 // pred_region
          %s269 = sand.u32 %s31, 1
          %s270 = scalar_lea.sflag [#allocation4], %s269
          %s271 = sand.u32 %s31, 1
          %s272 = smul.addr %s271, 64
          %s273 = scalar_lea.vmem [#allocation3], %s272
          %s274 = smul.u32 2, %s21
          %s276 = ssub.s32 1024, 1024
          %277 = vsyncadd %s270, %s276
          %s278 = smul.addr %s274, 8
          %s279 = smul.addr %s278, 64
          %s280 = scalar_lea.hbm %s0, %s279
          %s281 = sshll.u32 %s273, 4
          %s282 = int_to_ptr.vmem [resolvable:$true] %s281
          %287 = dma.hbm_to_vmem [thread:$0]  %s280, 1024, %s282, %s270, 64, 64, 4
        $region44: #{tpu_custom_call.1} parent=39 // pred_fallthru
          _
      $region40: #{tpu_custom_call.1} parent=5 // pred_fallthru
        _
      %p288 = scmp.le.s32.totalorder 1, %s21
      %p289 = scmp.lt.s32.totalorder %s21, 3
      %p290 = pnand %p288, %p289
      %p291 = pneg %p290
      // Predicated region
      $region45: #{tpu_custom_call.1} parent=5 // pred_check
        _
      $region46: #{tpu_custom_call.1} parent=5 // pred_check_branch
        %293 = sbr.rel (%p290) target = $region48
      $region47: #{tpu_custom_call.1} parent=5 // pred_region
        %s294 = ssub.s32 %s21, 1
        %s295 = sand.u32 %s34, 1
        %s296 = scalar_lea.sflag [#allocation4], %s295
        %s297 = sand.u32 %s34, 1
        %s298 = smul.addr %s297, 64
        %s299 = scalar_lea.vmem [#allocation3], %s298
        // Predicated region
        $region49: #{tpu_custom_call.1} parent=47 // pred_check
          %p300 = pneg %p47
        $region50: #{tpu_custom_call.1} parent=47 // pred_check_branch
          %302 = sbr.rel (%p300) target = $region52
        $region51: #{tpu_custom_call.1} parent=47 // pred_region
          %303 = dma.done %s296, 1024
        $region52: #{tpu_custom_call.1} parent=47 // pred_fallthru
          _
        // Predicated region
        $region53: #{tpu_custom_call.1} parent=47 // pred_check
          %p304 = pneg %p68
        $region54: #{tpu_custom_call.1} parent=47 // pred_check_branch
          %306 = sbr.rel (%p304) target = $region56
        $region55: #{tpu_custom_call.1} parent=47 // pred_region
          %307 = dma.done [#allocation7], 1024
        $region56: #{tpu_custom_call.1} parent=47 // pred_fallthru
          _
        // Predicated region
        $region57: #{tpu_custom_call.1} parent=47 // pred_check
          %p308 = pneg %p131
        $region58: #{tpu_custom_call.1} parent=47 // pred_check_branch
          %310 = sbr.rel (%p308) target = $region60
        $region59: #{tpu_custom_call.1} parent=47 // pred_region
          %311 = dma.done [#allocation7], 2048
        $region60: #{tpu_custom_call.1} parent=47 // pred_fallthru
          _
        // Predicated region
        $region61: #{tpu_custom_call.1} parent=47 // pred_check
          %p312 = pneg %p152
        $region62: #{tpu_custom_call.1} parent=47 // pred_check_branch
          %314 = sbr.rel (%p312) target = $region64
        $region63: #{tpu_custom_call.1} parent=47 // pred_region
          %315 = dma.done [#allocation10], 512
        $region64: #{tpu_custom_call.1} parent=47 // pred_fallthru
          _
        %s316 = sand.u32 %s34, 1
        %s317 = scalar_lea.sflag [#allocation4], %s316
        %s318 = sand.u32 %s34, 1
        %s319 = smul.addr %s318, 64
        %s320 = scalar_lea.vmem [#allocation3], %s319
        %p321 = pneg %p47
        %p322 = pneg %p44
        %p323 = pneg %p68
        %p324 = pneg %p65
        %p325 = pneg %p89
        %p326 = pneg %p86
        %p327 = pneg %p110
        %p328 = pneg %p107
        %p329 = pneg %p131
        %p330 = pneg %p128
        %p331 = pneg %p152
        %p332 = pneg %p149
        %p333 = pneg %p173
        %p334 = pneg %p170
        %p335 = pneg %p199
        %p336 = pneg %p196
        %s337 = sand.u32 %s186, 1
        %s338 = scalar_lea.sflag [#allocation5], %s337
        %s339 = sand.u32 %s186, 1
        %s340 = smul.addr %s339, 128
        %s341 = scalar_lea.vmem [#allocation11], %s340
        %s342 = smul.u32 2, %s26
        %s343 = smul.u32 2, %s26
        %v345 = vld [vmem:[%s299] sm:$0xf]
        %v346 = vld [vmem:[%s299 + $0x4] sm:$0xf]
        %v347 = vld [vmem:[%s299 + $0x8] sm:$0xf]
        %v348 = vld [vmem:[%s299 + $0xc] sm:$0xf]
        %v349 = vld [vmem:[%s299 + $0x10] sm:$0xf]
        %v350 = vld [vmem:[%s299 + $0x14] sm:$0xf]
        %v351 = vld [vmem:[%s299 + $0x18] sm:$0xf]
        %v352 = vld [vmem:[%s299 + $0x1c] sm:$0xf]
        %v353 = vld [vmem:[%s299 + $0x20] sm:$0xf]
        %v354 = vld [vmem:[%s299 + $0x24] sm:$0xf]
        %v355 = vld [vmem:[%s299 + $0x28] sm:$0xf]
        %v356 = vld [vmem:[%s299 + $0x2c] sm:$0xf]
        %v357 = vld [vmem:[%s299 + $0x30] sm:$0xf]
        %v358 = vld [vmem:[%s299 + $0x34] sm:$0xf]
        %v359 = vld [vmem:[%s299 + $0x38] sm:$0xf]
        %v360 = vld [vmem:[%s299 + $0x3c] sm:$0xf]
        %v361 = vld [vmem:[#allocation6] sm:$0xff]
        %v362 = vld [vmem:[#allocation6 + $0x8] sm:$0xff]
        %v363 = vld [vmem:[#allocation6 + $0x10] sm:$0xff]
        %v364 = vld [vmem:[#allocation6 + $0x18] sm:$0xff]
        %v365 = vld [vmem:[#allocation6 + $0x20] sm:$0xff]
        %v366 = vld [vmem:[#allocation6 + $0x28] sm:$0xff]
        %v367 = vld [vmem:[#allocation6 + $0x30] sm:$0xff]
        %v368 = vld [vmem:[#allocation6 + $0x38] sm:$0xff]
        %v369 = vld [vmem:[%s2] sm:$0x3]
        %v371 = vlaneseq
        %v372 = vshrl.u32 %v371, 7
        %v373 = vsub.s32 0, %v372
        %v374 = vrot.slane %v369, %v373
        %v375 = vlaneseq
        %v376 = vshrl.u32 %v375, 7
        %v377 = vsub.s32 1, %v376
        %v378 = vrot.slane %v369, %v377
        %v397 = vunpack.c.l.b16 %v345
        %v398 = vunpack.c.l.b16 %v346
        %v399 = vunpack.c.l.b16 %v347
        %v400 = vunpack.c.l.b16 %v348
        %v401 = vunpack.c.l.b16 %v349
        %v402 = vunpack.c.l.b16 %v350
        %v403 = vunpack.c.l.b16 %v351
        %v404 = vunpack.c.l.b16 %v352
        %v405 = vunpack.c.l.b16 %v353
        %v406 = vunpack.c.l.b16 %v354
        %v407 = vunpack.c.l.b16 %v355
        %v408 = vunpack.c.l.b16 %v356
        %v409 = vunpack.c.l.b16 %v357
        %v410 = vunpack.c.l.b16 %v358
        %v411 = vunpack.c.l.b16 %v359
        %v412 = vunpack.c.l.b16 %v360
        %v413 = vpack.c.b16 %v398, %v397
        %v414 = vpack.c.b16 %v400, %v399
        %v415 = vpack.c.b16 %v402, %v401
        %v416 = vpack.c.b16 %v404, %v403
        %v417 = vpack.c.b16 %v406, %v405
        %v418 = vpack.c.b16 %v408, %v407
        %v419 = vpack.c.b16 %v410, %v409
        %v420 = vpack.c.b16 %v412, %v411
        %v429 = vunpack.c.l.b16 %v361
        %v430 = vunpack.c.h.b16 %v361
        %v431 = vunpack.c.l.b16 %v362
        %v432 = vunpack.c.h.b16 %v362
        %v433 = vunpack.c.l.b16 %v363
        %v434 = vunpack.c.h.b16 %v363
        %v435 = vunpack.c.l.b16 %v364
        %v436 = vunpack.c.h.b16 %v364
        %v437 = vunpack.c.l.b16 %v365
        %v438 = vunpack.c.h.b16 %v365
        %v439 = vunpack.c.l.b16 %v366
        %v440 = vunpack.c.h.b16 %v366
        %v441 = vunpack.c.l.b16 %v367
        %v442 = vunpack.c.h.b16 %v367
        %v443 = vunpack.c.l.b16 %v368
        %v444 = vunpack.c.h.b16 %v368
        %v445 = vpack.c.b16 %v431, %v429
        %v446 = vpack.c.b16 %v432, %v430
        %v447 = vpack.c.b16 %v435, %v433
        %v448 = vpack.c.b16 %v436, %v434
        %v449 = vpack.c.b16 %v439, %v437
        %v450 = vpack.c.b16 %v440, %v438
        %v451 = vpack.c.b16 %v443, %v441
        %v452 = vpack.c.b16 %v444, %v442
        %vm461 = vcmask 523264
        %v463 = vsel %vm461, %v413, 0
        %v466 = vsel %vm461, %v414, 0
        %v469 = vsel %vm461, %v415, 0
        %v472 = vsel %vm461, %v416, 0
        %v475 = vsel %vm461, %v417, 0
        %v478 = vsel %vm461, %v418, 0
        %v481 = vsel %vm461, %v419, 0
        %v484 = vsel %vm461, %v420, 0
        %486 = vmatprep.subr.bf16.mxu0 %v446
        %487 = vmatpush1.bf16.msra.mxu0 %v445
        %488 = vmatprep.subr.bf16.mxu0 %v448
        %489 = vmatpush1.bf16.msra.mxu0 %v447
        %490 = vmatprep.subr.bf16.mxu0 %v450
        %491 = vmatpush1.bf16.msra.mxu0 %v449
        %492 = vmatprep.subr.bf16.mxu0 %v452
        %493 = vmatpush1.bf16.msra.mxu0 %v451
        %494 = vmatprep.subr.bf16.mxu0 0
        %495 = vmatpush1.bf16.msra.mxu0 0
        %496 = vmatprep.subr.bf16.mxu0 0
        %497 = vmatpush1.bf16.msra.mxu0 0
        %498 = vmatprep.subr.bf16.mxu0 0
        %499 = vmatpush1.bf16.msra.mxu0 0
        %500 = vmatprep.subr.bf16.mxu0 0
        %501 = vmatpush1.bf16.msra.mxu0 0
        %502 = vmatprep.subr.bf16.mxu0 0
        %503 = vmatpush1.bf16.msra.mxu0 0
        %504 = vmatprep.subr.bf16.mxu0 0
        %505 = vmatpush1.bf16.msra.mxu0 0
        %506 = vmatprep.subr.bf16.mxu0 0
        %507 = vmatpush1.bf16.msra.mxu0 0
        %508 = vmatprep.subr.bf16.mxu0 0
        %509 = vmatpush1.bf16.msra.mxu0 0
        %510 = vmatprep.subr.bf16.mxu0 0
        %511 = vmatpush1.bf16.msra.mxu0 0
        %512 = vmatprep.subr.bf16.mxu0 0
        %513 = vmatpush1.bf16.msra.mxu0 0
        %514 = vmatprep.subr.bf16.mxu0 0
        %515 = vmatpush1.bf16.msra.mxu0 0
        %516 = vmatprep.subr.bf16.mxu0 0
        %517 = vmatpush1.bf16.msra.mxu0 0
        %518 = vmatprep.mubr.bf16.mxu0 0
        %519 = vmatmul.mubr.bf16.gmra.mrb[0].mxu0 %v463
        %v520 = vpop.f32.mrb[0].mxu0
        %v521 = vadd.f32 %v374, %v520
        %v522 = vpop.f32.mrb[0].mxu0
        %v523 = vadd.f32 %v378, %v522
        %v524 = vpop.f32.mrb[0].mxu0
        %v525 = vadd.f32 %v374, %v524
        %v526 = vpop.f32.mrb[0].mxu0
        %v527 = vadd.f32 %v378, %v526
        %528 = vmatprep.mubr.bf16.mxu0 0
        %529 = vmatmul.mubr.bf16.gmra.mrb[0].mxu0 %v466
        %v530 = vpop.f32.mrb[0].mxu0
        %v531 = vadd.f32 %v374, %v530
        %v532 = vpop.f32.mrb[0].mxu0
        %v533 = vadd.f32 %v378, %v532
        %v534 = vpop.f32.mrb[0].mxu0
        %v535 = vadd.f32 %v374, %v534
        %v536 = vpop.f32.mrb[0].mxu0
        %v537 = vadd.f32 %v378, %v536
        %538 = vmatprep.mubr.bf16.mxu0 0
        %539 = vmatmul.mubr.bf16.gmra.mrb[0].mxu0 %v469
        %v540 = vpop.f32.mrb[0].mxu0
        %v541 = vadd.f32 %v374, %v540
        %v542 = vpop.f32.mrb[0].mxu0
        %v543 = vadd.f32 %v378, %v542
        %v544 = vpop.f32.mrb[0].mxu0
        %v545 = vadd.f32 %v374, %v544
        %v546 = vpop.f32.mrb[0].mxu0
        %v547 = vadd.f32 %v378, %v546
        %548 = vmatprep.mubr.bf16.mxu0 0
        %549 = vmatmul.mubr.bf16.gmra.mrb[0].mxu0 %v472
        %v550 = vpop.f32.mrb[0].mxu0
        %v551 = vadd.f32 %v374, %v550
        %v552 = vpop.f32.mrb[0].mxu0
        %v553 = vadd.f32 %v378, %v552
        %v554 = vpop.f32.mrb[0].mxu0
        %v555 = vadd.f32 %v374, %v554
        %v556 = vpop.f32.mrb[0].mxu0
        %v557 = vadd.f32 %v378, %v556
        %558 = vmatprep.mubr.bf16.mxu0 0
        %559 = vmatmul.mubr.bf16.gmra.mrb[0].mxu0 %v475
        %v560 = vpop.f32.mrb[0].mxu0
        %v561 = vadd.f32 %v374, %v560
        %v562 = vpop.f32.mrb[0].mxu0
        %v563 = vadd.f32 %v378, %v562
        %v564 = vpop.f32.mrb[0].mxu0
        %v565 = vadd.f32 %v374, %v564
        %v566 = vpop.f32.mrb[0].mxu0
        %v567 = vadd.f32 %v378, %v566
        %568 = vmatprep.mubr.bf16.mxu0 0
        %569 = vmatmul.mubr.bf16.gmra.mrb[0].mxu0 %v478
        %v570 = vpop.f32.mrb[0].mxu0
        %v571 = vadd.f32 %v374, %v570
        %v572 = vpop.f32.mrb[0].mxu0
        %v573 = vadd.f32 %v378, %v572
        %v574 = vpop.f32.mrb[0].mxu0
        %v575 = vadd.f32 %v374, %v574
        %v576 = vpop.f32.mrb[0].mxu0
        %v577 = vadd.f32 %v378, %v576
        %578 = vmatprep.mubr.bf16.mxu0 0
        %579 = vmatmul.mubr.bf16.gmra.mrb[0].mxu0 %v481
        %v580 = vpop.f32.mrb[0].mxu0
        %v581 = vadd.f32 %v374, %v580
        %v582 = vpop.f32.mrb[0].mxu0
        %v583 = vadd.f32 %v378, %v582
        %v584 = vpop.f32.mrb[0].mxu0
        %v585 = vadd.f32 %v374, %v584
        %v586 = vpop.f32.mrb[0].mxu0
        %v587 = vadd.f32 %v378, %v586
        %588 = vmatprep.mubr.bf16.mxu0 0
        %589 = vmatmul.mubr.bf16.gmra.mrb[0].mxu0 %v484
        %v590 = vpop.f32.mrb[0].mxu0
        %v591 = vadd.f32 %v374, %v590
        %v592 = vpop.f32.mrb[0].mxu0
        %v593 = vadd.f32 %v378, %v592
        %v594 = vpop.f32.mrb[0].mxu0
        %v595 = vadd.f32 %v374, %v594
        %v596 = vpop.f32.mrb[0].mxu0
        %v597 = vadd.f32 %v378, %v596
        %598 = vdwg.mxu0
        %v599 = vmul.f32 %v521, %v521
        %v600 = vmul.f32 %v525, %v525
        %v601 = vmul.f32 %v531, %v531
        %v602 = vmul.f32 %v535, %v535
        %v603 = vmul.f32 %v541, %v541
        %v604 = vmul.f32 %v545, %v545
        %v605 = vmul.f32 %v551, %v551
        %v606 = vmul.f32 %v555, %v555
        %v607 = vmul.f32 %v561, %v561
        %v608 = vmul.f32 %v565, %v565
        %v609 = vmul.f32 %v571, %v571
        %v610 = vmul.f32 %v575, %v575
        %v611 = vmul.f32 %v581, %v581
        %v612 = vmul.f32 %v585, %v585
        %v613 = vmul.f32 %v591, %v591
        %v614 = vmul.f32 %v595, %v595
        %vm615 = vcmask 261120
        %v616 = vsel %vm615, %v599, 0.0
        %617 = vadd.xlane.f32.xlu0 %v616
        %v618 = vpop.xlane.xlu0 %617
        %v619 = vsel %vm615, %v600, 0.0
        %620 = vadd.xlane.f32.xlu0 %v619
        %v621 = vpop.xlane.xlu0 %620
        %v622 = vsel %vm615, %v601, 0.0
        %623 = vadd.xlane.f32.xlu0 %v622
        %v624 = vpop.xlane.xlu0 %623
        %v625 = vsel %vm615, %v602, 0.0
        %626 = vadd.xlane.f32.xlu0 %v625
        %v627 = vpop.xlane.xlu0 %626
        %v628 = vsel %vm615, %v603, 0.0
        %629 = vadd.xlane.f32.xlu0 %v628
        %v630 = vpop.xlane.xlu0 %629
        %v631 = vsel %vm615, %v604, 0.0
        %632 = vadd.xlane.f32.xlu0 %v631
        %v633 = vpop.xlane.xlu0 %632
        %v634 = vsel %vm615, %v605, 0.0
        %635 = vadd.xlane.f32.xlu0 %v634
        %v636 = vpop.xlane.xlu0 %635
        %v637 = vsel %vm615, %v606, 0.0
        %638 = vadd.xlane.f32.xlu0 %v637
        %v639 = vpop.xlane.xlu0 %638
        %v640 = vsel %vm615, %v607, 0.0
        %641 = vadd.xlane.f32.xlu0 %v640
        %v642 = vpop.xlane.xlu0 %641
        %v643 = vsel %vm615, %v608, 0.0
        %644 = vadd.xlane.f32.xlu0 %v643
        %v645 = vpop.xlane.xlu0 %644
        %v646 = vsel %vm615, %v609, 0.0
        %647 = vadd.xlane.f32.xlu0 %v646
        %v648 = vpop.xlane.xlu0 %647
        %v649 = vsel %vm615, %v610, 0.0
        %650 = vadd.xlane.f32.xlu0 %v649
        %v651 = vpop.xlane.xlu0 %650
        %v652 = vsel %vm615, %v611, 0.0
        %653 = vadd.xlane.f32.xlu0 %v652
        %v654 = vpop.xlane.xlu0 %653
        %v655 = vsel %vm615, %v612, 0.0
        %656 = vadd.xlane.f32.xlu0 %v655
        %v657 = vpop.xlane.xlu0 %656
        %v658 = vsel %vm615, %v613, 0.0
        %659 = vadd.xlane.f32.xlu0 %v658
        %v660 = vpop.xlane.xlu0 %659
        %v661 = vsel %vm615, %v614, 0.0
        %662 = vadd.xlane.f32.xlu0 %v661
        %v663 = vpop.xlane.xlu0 %662
        %v664 = vmax.f32 %v618, 1e-24
        %v665 = vmax.f32 %v621, 1e-24
        %v666 = vmax.f32 %v624, 1e-24
        %v667 = vmax.f32 %v627, 1e-24
        %v668 = vmax.f32 %v630, 1e-24
        %v669 = vmax.f32 %v633, 1e-24
        %v670 = vmax.f32 %v636, 1e-24
        %v671 = vmax.f32 %v639, 1e-24
        %v672 = vmax.f32 %v642, 1e-24
        %v673 = vmax.f32 %v645, 1e-24
        %v674 = vmax.f32 %v648, 1e-24
        %v675 = vmax.f32 %v651, 1e-24
        %v676 = vmax.f32 %v654, 1e-24
        %v677 = vmax.f32 %v657, 1e-24
        %v678 = vmax.f32 %v660, 1e-24
        %v679 = vmax.f32 %v663, 1e-24
        %v680 = vrsqrt.pop %v664
        %v681 = vrsqrt.pop %v665
        %v682 = vrsqrt.pop %v666
        %v683 = vrsqrt.pop %v667
        %v684 = vrsqrt.pop %v668
        %v685 = vrsqrt.pop %v669
        %v686 = vrsqrt.pop %v670
        %v687 = vrsqrt.pop %v671
        %v688 = vrsqrt.pop %v672
        %v689 = vrsqrt.pop %v673
        %v690 = vrsqrt.pop %v674
        %v691 = vrsqrt.pop %v675
        %v692 = vrsqrt.pop %v676
        %v693 = vrsqrt.pop %v677
        %v694 = vrsqrt.pop %v678
        %v695 = vrsqrt.pop %v679
        %v696 = vmul.f32 %v521, %v680
        %v697 = vmul.f32 %v525, %v681
        %v698 = vmul.f32 %v531, %v682
        %v699 = vmul.f32 %v535, %v683
        %v700 = vmul.f32 %v541, %v684
        %v701 = vmul.f32 %v545, %v685
        %v702 = vmul.f32 %v551, %v686
        %v703 = vmul.f32 %v555, %v687
        %v704 = vmul.f32 %v561, %v688
        %v705 = vmul.f32 %v565, %v689
        %v706 = vmul.f32 %v571, %v690
        %v707 = vmul.f32 %v575, %v691
        %v708 = vmul.f32 %v581, %v692
        %v709 = vmul.f32 %v585, %v693
        %v710 = vmul.f32 %v591, %v694
        %v711 = vmul.f32 %v595, %v695
        %v712 = vld [vmem:[%s3] sm:$0x1]
        %v714 = vlaneseq
        %v715 = vshrl.u32 %v714, 7
        %v716 = vsub.s32 0, %v715
        %v717 = vrot.slane %v712, %v716
        %v719 = vmul.f32 %v696, %v717
        %v720 = vmul.f32 %v697, %v717
        %v721 = vmul.f32 %v698, %v717
        %v722 = vmul.f32 %v699, %v717
        %v723 = vmul.f32 %v700, %v717
        %v724 = vmul.f32 %v701, %v717
        %v725 = vmul.f32 %v702, %v717
        %v726 = vmul.f32 %v703, %v717
        %v727 = vmul.f32 %v704, %v717
        %v728 = vmul.f32 %v705, %v717
        %v729 = vmul.f32 %v706, %v717
        %v730 = vmul.f32 %v707, %v717
        %v731 = vmul.f32 %v708, %v717
        %v732 = vmul.f32 %v709, %v717
        %v733 = vmul.f32 %v710, %v717
        %v734 = vmul.f32 %v711, %v717
        %751 = vrot.lane.b32.xlu0 %v599, 64
        %v752 = vpop.permute.xlu0 %751
        %753 = vrot.lane.b32.xlu0 %v600, 64
        %v754 = vpop.permute.xlu0 %753
        %755 = vrot.lane.b32.xlu0 %v601, 64
        %v756 = vpop.permute.xlu0 %755
        %757 = vrot.lane.b32.xlu0 %v602, 64
        %v758 = vpop.permute.xlu0 %757
        %759 = vrot.lane.b32.xlu0 %v603, 64
        %v760 = vpop.permute.xlu0 %759
        %761 = vrot.lane.b32.xlu0 %v604, 64
        %v762 = vpop.permute.xlu0 %761
        %763 = vrot.lane.b32.xlu0 %v605, 64
        %v764 = vpop.permute.xlu0 %763
        %765 = vrot.lane.b32.xlu0 %v606, 64
        %v766 = vpop.permute.xlu0 %765
        %767 = vrot.lane.b32.xlu0 %v607, 64
        %v768 = vpop.permute.xlu0 %767
        %769 = vrot.lane.b32.xlu0 %v608, 64
        %v770 = vpop.permute.xlu0 %769
        %771 = vrot.lane.b32.xlu0 %v609, 64
        %v772 = vpop.permute.xlu0 %771
        %773 = vrot.lane.b32.xlu0 %v610, 64
        %v774 = vpop.permute.xlu0 %773
        %775 = vrot.lane.b32.xlu0 %v611, 64
        %v776 = vpop.permute.xlu0 %775
        %777 = vrot.lane.b32.xlu0 %v612, 64
        %v778 = vpop.permute.xlu0 %777
        %779 = vrot.lane.b32.xlu0 %v613, 64
        %v780 = vpop.permute.xlu0 %779
        %781 = vrot.lane.b32.xlu0 %v614, 64
        %v782 = vpop.permute.xlu0 %781
        %v799 = vsel %vm615, %v752, 0.0
        %800 = vadd.xlane.f32.xlu0 %v799
        %v801 = vpop.xlane.xlu0 %800
        %v802 = vsel %vm615, %v754, 0.0
        %803 = vadd.xlane.f32.xlu0 %v802
        %v804 = vpop.xlane.xlu0 %803
        %v805 = vsel %vm615, %v756, 0.0
        %806 = vadd.xlane.f32.xlu0 %v805
        %v807 = vpop.xlane.xlu0 %806
        %v808 = vsel %vm615, %v758, 0.0
        %809 = vadd.xlane.f32.xlu0 %v808
        %v810 = vpop.xlane.xlu0 %809
        %v811 = vsel %vm615, %v760, 0.0
        %812 = vadd.xlane.f32.xlu0 %v811
        %v813 = vpop.xlane.xlu0 %812
        %v814 = vsel %vm615, %v762, 0.0
        %815 = vadd.xlane.f32.xlu0 %v814
        %v816 = vpop.xlane.xlu0 %815
        %v817 = vsel %vm615, %v764, 0.0
        %818 = vadd.xlane.f32.xlu0 %v817
        %v819 = vpop.xlane.xlu0 %818
        %v820 = vsel %vm615, %v766, 0.0
        %821 = vadd.xlane.f32.xlu0 %v820
        %v822 = vpop.xlane.xlu0 %821
        %v823 = vsel %vm615, %v768, 0.0
        %824 = vadd.xlane.f32.xlu0 %v823
        %v825 = vpop.xlane.xlu0 %824
        %v826 = vsel %vm615, %v770, 0.0
        %827 = vadd.xlane.f32.xlu0 %v826
        %v828 = vpop.xlane.xlu0 %827
        %v829 = vsel %vm615, %v772, 0.0
        %830 = vadd.xlane.f32.xlu0 %v829
        %v831 = vpop.xlane.xlu0 %830
        %v832 = vsel %vm615, %v774, 0.0
        %833 = vadd.xlane.f32.xlu0 %v832
        %v834 = vpop.xlane.xlu0 %833
        %v835 = vsel %vm615, %v776, 0.0
        %836 = vadd.xlane.f32.xlu0 %v835
        %v837 = vpop.xlane.xlu0 %836
        %v838 = vsel %vm615, %v778, 0.0
        %839 = vadd.xlane.f32.xlu0 %v838
        %v840 = vpop.xlane.xlu0 %839
        %v841 = vsel %vm615, %v780, 0.0
        %842 = vadd.xlane.f32.xlu0 %v841
        %v843 = vpop.xlane.xlu0 %842
        %v844 = vsel %vm615, %v782, 0.0
        %845 = vadd.xlane.f32.xlu0 %v844
        %v846 = vpop.xlane.xlu0 %845
        %v847 = vmax.f32 %v801, 1e-24
        %v848 = vmax.f32 %v804, 1e-24
        %v849 = vmax.f32 %v807, 1e-24
        %v850 = vmax.f32 %v810, 1e-24
        %v851 = vmax.f32 %v813, 1e-24
        %v852 = vmax.f32 %v816, 1e-24
        %v853 = vmax.f32 %v819, 1e-24
        %v854 = vmax.f32 %v822, 1e-24
        %v855 = vmax.f32 %v825, 1e-24
        %v856 = vmax.f32 %v828, 1e-24
        %v857 = vmax.f32 %v831, 1e-24
        %v858 = vmax.f32 %v834, 1e-24
        %v859 = vmax.f32 %v837, 1e-24
        %v860 = vmax.f32 %v840, 1e-24
        %v861 = vmax.f32 %v843, 1e-24
        %v862 = vmax.f32 %v846, 1e-24
        %v863 = vrsqrt.pop %v847
        %v864 = vrsqrt.pop %v848
        %v865 = vrsqrt.pop %v849
        %v866 = vrsqrt.pop %v850
        %v867 = vrsqrt.pop %v851
        %v868 = vrsqrt.pop %v852
        %v869 = vrsqrt.pop %v853
        %v870 = vrsqrt.pop %v854
        %v871 = vrsqrt.pop %v855
        %v872 = vrsqrt.pop %v856
        %v873 = vrsqrt.pop %v857
        %v874 = vrsqrt.pop %v858
        %v875 = vrsqrt.pop %v859
        %v876 = vrsqrt.pop %v860
        %v877 = vrsqrt.pop %v861
        %v878 = vrsqrt.pop %v862
        %v879 = vmul.f32 %v521, %v863
        %v880 = vmul.f32 %v525, %v864
        %v881 = vmul.f32 %v531, %v865
        %v882 = vmul.f32 %v535, %v866
        %v883 = vmul.f32 %v541, %v867
        %v884 = vmul.f32 %v545, %v868
        %v885 = vmul.f32 %v551, %v869
        %v886 = vmul.f32 %v555, %v870
        %v887 = vmul.f32 %v561, %v871
        %v888 = vmul.f32 %v565, %v872
        %v889 = vmul.f32 %v571, %v873
        %v890 = vmul.f32 %v575, %v874
        %v891 = vmul.f32 %v581, %v875
        %v892 = vmul.f32 %v585, %v876
        %v893 = vmul.f32 %v591, %v877
        %v894 = vmul.f32 %v595, %v878
        %v895 = vld [vmem:[#allocation8] sm:$0xff]
        %v896 = vld [vmem:[#allocation8 + $0x8] sm:$0xff]
        %v897 = vld [vmem:[#allocation8 + $0x10] sm:$0xff]
        %v898 = vld [vmem:[#allocation8 + $0x18] sm:$0xff]
        %v899 = vld [vmem:[#allocation8 + $0x20] sm:$0xff]
        %v900 = vld [vmem:[#allocation8 + $0x28] sm:$0xff]
        %v901 = vld [vmem:[#allocation8 + $0x30] sm:$0xff]
        %v902 = vld [vmem:[#allocation8 + $0x38] sm:$0xff]
        %911 = vrot.lane.b32.xlu0 %v879, 64
        %v912 = vpop.permute.xlu0 %911
        %913 = vrot.lane.b32.xlu0 %v880, 64
        %v914 = vpop.permute.xlu0 %913
        %915 = vrot.lane.b32.xlu0 %v881, 64
        %v916 = vpop.permute.xlu0 %915
        %917 = vrot.lane.b32.xlu0 %v882, 64
        %v918 = vpop.permute.xlu0 %917
        %919 = vrot.lane.b32.xlu0 %v883, 64
        %v920 = vpop.permute.xlu0 %919
        %921 = vrot.lane.b32.xlu0 %v884, 64
        %v922 = vpop.permute.xlu0 %921
        %923 = vrot.lane.b32.xlu0 %v885, 64
        %v924 = vpop.permute.xlu0 %923
        %925 = vrot.lane.b32.xlu0 %v886, 64
        %v926 = vpop.permute.xlu0 %925
        %v928 = vsel %vm615, %v719, 0
        %v931 = vsel %vm615, %v720, 0
        %v934 = vsel %vm615, %v721, 0
        %v937 = vsel %vm615, %v722, 0
        %v940 = vsel %vm615, %v723, 0
        %v943 = vsel %vm615, %v724, 0
        %v946 = vsel %vm615, %v725, 0
        %v949 = vsel %vm615, %v726, 0
        %v951 = vsel %vm615, %v912, 0
        %v953 = vsel %vm615, %v914, 0
        %v955 = vsel %vm615, %v916, 0
        %v957 = vsel %vm615, %v918, 0
        %v959 = vsel %vm615, %v920, 0
        %v961 = vsel %vm615, %v922, 0
        %v963 = vsel %vm615, %v924, 0
        %v965 = vsel %vm615, %v926, 0
        %967 = vmatprep.subr.mxu0 0.0
        %968 = vmatpush1.xpose.msra.mxu0 %v951
        %969 = vmatprep.subr.mxu0 0.0
        %970 = vmatpush1.xpose.msra.mxu0 %v953
        %971 = vmatprep.subr.mxu0 0.0
        %972 = vmatpush1.xpose.msra.mxu0 %v955
        %973 = vmatprep.subr.mxu0 0.0
        %974 = vmatpush1.xpose.msra.mxu0 %v957
        %975 = vmatprep.subr.mxu0 0.0
        %976 = vmatpush1.xpose.msra.mxu0 %v959
        %977 = vmatprep.subr.mxu0 0.0
        %978 = vmatpush1.xpose.msra.mxu0 %v961
        %979 = vmatprep.subr.mxu0 0.0
        %980 = vmatpush1.xpose.msra.mxu0 %v963
        %981 = vmatprep.subr.mxu0 0.0
        %982 = vmatpush1.xpose.msra.mxu0 %v965
        %983 = vmatprep.subr.mxu0 0.0
        %984 = vmatpush1.xpose.msra.mxu0 0.0
        %985 = vmatprep.subr.mxu0 0.0
        %986 = vmatpush1.xpose.msra.mxu0 0.0
        %987 = vmatprep.subr.mxu0 0.0
        %988 = vmatpush1.xpose.msra.mxu0 0.0
        %989 = vmatprep.subr.mxu0 0.0
        %990 = vmatpush1.xpose.msra.mxu0 0.0
        %991 = vmatprep.subr.mxu0 0.0
        %992 = vmatpush1.xpose.msra.mxu0 0.0
        %993 = vmatprep.subr.mxu0 0.0
        %994 = vmatpush1.xpose.msra.mxu0 0.0
        %995 = vmatprep.subr.mxu0 0.0
        %996 = vmatpush1.xpose.msra.mxu0 0.0
        %997 = vmatprep.subr.mxu0 0.0
        %998 = vmatpush1.xpose.msra.mxu0 0.0
        %999 = vmatprep.subr.mxu0 0.0
        %1000 = vmatpush1.xpose.msra.mxu0 0.0
        %1001 = vmatprep.subr.mxu0 0.0
        %1002 = vmatpush1.xpose.msra.mxu0 0.0
        %1003 = vmatprep.subr.mxu0 0.0
        %1004 = vmatpush1.xpose.msra.mxu0 0.0
        %1005 = vmatprep.subr.mxu0 0.0
        %1006 = vmatpush1.xpose.msra.mxu0 0.0
        %1007 = vmatprep.subr.mxu0 0.0
        %1008 = vmatpush1.xpose.msra.mxu0 0.0
        %1009 = vmatprep.subr.mxu0 0.0
        %1010 = vmatpush1.xpose.msra.mxu0 0.0
        %1011 = vmatprep.subr.mxu0 0.0
        %1012 = vmatpush1.xpose.msra.mxu0 0.0
        %1013 = vmatprep.subr.mxu0 0.0
        %1014 = vmatpush1.xpose.msra.mxu0 0.0
        %1015 = vmatprep.subr.mxu0 0.0
        %1016 = vmatpush1.xpose.msra.mxu0 0.0
        %1017 = vmatprep.subr.mxu0 0.0
        %1018 = vmatpush1.xpose.msra.mxu0 0.0
        %1019 = vmatprep.subr.mxu0 0.0
        %1020 = vmatpush1.xpose.msra.mxu0 0.0
        %1021 = vmatprep.subr.mxu0 0.0
        %1022 = vmatpush1.xpose.msra.mxu0 0.0
        %1023 = vmatprep.subr.mxu0 0.0
        %1024 = vmatpush1.xpose.msra.mxu0 0.0
        %1025 = vmatprep.subr.mxu0 0.0
        %1026 = vmatpush1.xpose.msra.mxu0 0.0
        %1027 = vmatprep.subr.mxu0 0.0
        %1028 = vmatpush1.xpose.msra.mxu0 0.0
        %1029 = vmatprep.subr.mxu0 0.0
        %1030 = vmatpush1.xpose.msra.mxu0 0.0
        %1031 = vmatprep.mubr.f32.mxu0 0.0
        %1032 = vmatmul.mubr.f32.gmra.mrb[0].mxu0 %v928
        %v1033 = vpop.f32.mrb[0].mxu0
        %v1034 = vadd.f32 %v895, %v1033
        %v1035 = vpop.f32.mrb[0].mxu0
        %1036 = vmatprep.mubr.f32.mxu0 0.0
        %1037 = vmatmul.mubr.f32.gmra.mrb[0].mxu0 %v931
        %v1038 = vpop.f32.mrb[0].mxu0
        %v1039 = vadd.f32 %v896, %v1038
        %v1040 = vpop.f32.mrb[0].mxu0
        %1041 = vmatprep.mubr.f32.mxu0 0.0
        %1042 = vmatmul.mubr.f32.gmra.mrb[0].mxu0 %v934
        %v1043 = vpop.f32.mrb[0].mxu0
        %v1044 = vadd.f32 %v897, %v1043
        %v1045 = vpop.f32.mrb[0].mxu0
        %1046 = vmatprep.mubr.f32.mxu0 0.0
        %1047 = vmatmul.mubr.f32.gmra.mrb[0].mxu0 %v937
        %v1048 = vpop.f32.mrb[0].mxu0
        %v1049 = vadd.f32 %v898, %v1048
        %v1050 = vpop.f32.mrb[0].mxu0
        %1051 = vmatprep.mubr.f32.mxu0 0.0
        %1052 = vmatmul.mubr.f32.gmra.mrb[0].mxu0 %v940
        %v1053 = vpop.f32.mrb[0].mxu0
        %v1054 = vadd.f32 %v899, %v1053
        %v1055 = vpop.f32.mrb[0].mxu0
        %1056 = vmatprep.mubr.f32.mxu0 0.0
        %1057 = vmatmul.mubr.f32.gmra.mrb[0].mxu0 %v943
        %v1058 = vpop.f32.mrb[0].mxu0
        %v1059 = vadd.f32 %v900, %v1058
        %v1060 = vpop.f32.mrb[0].mxu0
        %1061 = vmatprep.mubr.f32.mxu0 0.0
        %1062 = vmatmul.mubr.f32.gmra.mrb[0].mxu0 %v946
        %v1063 = vpop.f32.mrb[0].mxu0
        %v1064 = vadd.f32 %v901, %v1063
        %v1065 = vpop.f32.mrb[0].mxu0
        %1066 = vmatprep.mubr.f32.mxu0 0.0
        %1067 = vmatmul.mubr.f32.gmra.mrb[0].mxu0 %v949
        %v1068 = vpop.f32.mrb[0].mxu0
        %v1069 = vadd.f32 %v902, %v1068
        %v1070 = vpop.f32.mrb[0].mxu0
        %1071 = vdwg.mxu0
        %1080 = vrot.lane.b32.xlu0 %v887, 64
        %v1081 = vpop.permute.xlu0 %1080
        %1082 = vrot.lane.b32.xlu0 %v888, 64
        %v1083 = vpop.permute.xlu0 %1082
        %1084 = vrot.lane.b32.xlu0 %v889, 64
        %v1085 = vpop.permute.xlu0 %1084
        %1086 = vrot.lane.b32.xlu0 %v890, 64
        %v1087 = vpop.permute.xlu0 %1086
        %1088 = vrot.lane.b32.xlu0 %v891, 64
        %v1089 = vpop.permute.xlu0 %1088
        %1090 = vrot.lane.b32.xlu0 %v892, 64
        %v1091 = vpop.permute.xlu0 %1090
        %1092 = vrot.lane.b32.xlu0 %v893, 64
        %v1093 = vpop.permute.xlu0 %1092
        %1094 = vrot.lane.b32.xlu0 %v894, 64
        %v1095 = vpop.permute.xlu0 %1094
        %v1097 = vsel %vm615, %v727, 0
        %v1100 = vsel %vm615, %v728, 0
        %v1103 = vsel %vm615, %v729, 0
        %v1106 = vsel %vm615, %v730, 0
        %v1109 = vsel %vm615, %v731, 0
        %v1112 = vsel %vm615, %v732, 0
        %v1115 = vsel %vm615, %v733, 0
        %v1118 = vsel %vm615, %v734, 0
        %v1120 = vsel %vm615, %v1081, 0
        %v1122 = vsel %vm615, %v1083, 0
        %v1124 = vsel %vm615, %v1085, 0
        %v1126 = vsel %vm615, %v1087, 0
        %v1128 = vsel %vm615, %v1089, 0
        %v1130 = vsel %vm615, %v1091, 0
        %v1132 = vsel %vm615, %v1093, 0
        %v1134 = vsel %vm615, %v1095, 0
        %1136 = vmatprep.subr.mxu0 0.0
        %1137 = vmatpush1.xpose.msra.mxu0 %v1120
        %1138 = vmatprep.subr.mxu0 0.0
        %1139 = vmatpush1.xpose.msra.mxu0 %v1122
        %1140 = vmatprep.subr.mxu0 0.0
        %1141 = vmatpush1.xpose.msra.mxu0 %v1124
        %1142 = vmatprep.subr.mxu0 0.0
        %1143 = vmatpush1.xpose.msra.mxu0 %v1126
        %1144 = vmatprep.subr.mxu0 0.0
        %1145 = vmatpush1.xpose.msra.mxu0 %v1128
        %1146 = vmatprep.subr.mxu0 0.0
        %1147 = vmatpush1.xpose.msra.mxu0 %v1130
        %1148 = vmatprep.subr.mxu0 0.0
        %1149 = vmatpush1.xpose.msra.mxu0 %v1132
        %1150 = vmatprep.subr.mxu0 0.0
        %1151 = vmatpush1.xpose.msra.mxu0 %v1134
        %1152 = vmatprep.subr.mxu0 0.0
        %1153 = vmatpush1.xpose.msra.mxu0 0.0
        %1154 = vmatprep.subr.mxu0 0.0
        %1155 = vmatpush1.xpose.msra.mxu0 0.0
        %1156 = vmatprep.subr.mxu0 0.0
        %1157 = vmatpush1.xpose.msra.mxu0 0.0
        %1158 = vmatprep.subr.mxu0 0.0
        %1159 = vmatpush1.xpose.msra.mxu0 0.0
        %1160 = vmatprep.subr.mxu0 0.0
        %1161 = vmatpush1.xpose.msra.mxu0 0.0
        %1162 = vmatprep.subr.mxu0 0.0
        %1163 = vmatpush1.xpose.msra.mxu0 0.0
        %1164 = vmatprep.subr.mxu0 0.0
        %1165 = vmatpush1.xpose.msra.mxu0 0.0
        %1166 = vmatprep.subr.mxu0 0.0
        %1167 = vmatpush1.xpose.msra.mxu0 0.0
        %1168 = vmatprep.subr.mxu0 0.0
        %1169 = vmatpush1.xpose.msra.mxu0 0.0
        %1170 = vmatprep.subr.mxu0 0.0
        %1171 = vmatpush1.xpose.msra.mxu0 0.0
        %1172 = vmatprep.subr.mxu0 0.0
        %1173 = vmatpush1.xpose.msra.mxu0 0.0
        %1174 = vmatprep.subr.mxu0 0.0
        %1175 = vmatpush1.xpose.msra.mxu0 0.0
        %1176 = vmatprep.subr.mxu0 0.0
        %1177 = vmatpush1.xpose.msra.mxu0 0.0
        %1178 = vmatprep.subr.mxu0 0.0
        %1179 = vmatpush1.xpose.msra.mxu0 0.0
        %1180 = vmatprep.subr.mxu0 0.0
        %1181 = vmatpush1.xpose.msra.mxu0 0.0
        %1182 = vmatprep.subr.mxu0 0.0
        %1183 = vmatpush1.xpose.msra.mxu0 0.0
        %1184 = vmatprep.subr.mxu0 0.0
        %1185 = vmatpush1.xpose.msra.mxu0 0.0
        %1186 = vmatprep.subr.mxu0 0.0
        %1187 = vmatpush1.xpose.msra.mxu0 0.0
        %1188 = vmatprep.subr.mxu0 0.0
        %1189 = vmatpush1.xpose.msra.mxu0 0.0
        %1190 = vmatprep.subr.mxu0 0.0
        %1191 = vmatpush1.xpose.msra.mxu0 0.0
        %1192 = vmatprep.subr.mxu0 0.0
        %1193 = vmatpush1.xpose.msra.mxu0 0.0
        %1194 = vmatprep.subr.mxu0 0.0
        %1195 = vmatpush1.xpose.msra.mxu0 0.0
        %1196 = vmatprep.subr.mxu0 0.0
        %1197 = vmatpush1.xpose.msra.mxu0 0.0
        %1198 = vmatprep.subr.mxu0 0.0
        %1199 = vmatpush1.xpose.msra.mxu0 0.0
        %1200 = vmatprep.mubr.f32.mxu0 0.0
        %1201 = vmatmul.mubr.f32.gmra.mrb[0].mxu0 %v1097
        %v1202 = vpop.f32.mrb[0].mxu0
        %v1203 = vadd.f32 %v895, %v1202
        %v1204 = vpop.f32.mrb[0].mxu0
        %1205 = vmatprep.mubr.f32.mxu0 0.0
        %1206 = vmatmul.mubr.f32.gmra.mrb[0].mxu0 %v1100
        %v1207 = vpop.f32.mrb[0].mxu0
        %v1208 = vadd.f32 %v896, %v1207
        %v1209 = vpop.f32.mrb[0].mxu0
        %1210 = vmatprep.mubr.f32.mxu0 0.0
        %1211 = vmatmul.mubr.f32.gmra.mrb[0].mxu0 %v1103
        %v1212 = vpop.f32.mrb[0].mxu0
        %v1213 = vadd.f32 %v897, %v1212
        %v1214 = vpop.f32.mrb[0].mxu0
        %1215 = vmatprep.mubr.f32.mxu0 0.0
        %1216 = vmatmul.mubr.f32.gmra.mrb[0].mxu0 %v1106
        %v1217 = vpop.f32.mrb[0].mxu0
        %v1218 = vadd.f32 %v898, %v1217
        %v1219 = vpop.f32.mrb[0].mxu0
        %1220 = vmatprep.mubr.f32.mxu0 0.0
        %1221 = vmatmul.mubr.f32.gmra.mrb[0].mxu0 %v1109
        %v1222 = vpop.f32.mrb[0].mxu0
        %v1223 = vadd.f32 %v899, %v1222
        %v1224 = vpop.f32.mrb[0].mxu0
        %1225 = vmatprep.mubr.f32.mxu0 0.0
        %1226 = vmatmul.mubr.f32.gmra.mrb[0].mxu0 %v1112
        %v1227 = vpop.f32.mrb[0].mxu0
        %v1228 = vadd.f32 %v900, %v1227
        %v1229 = vpop.f32.mrb[0].mxu0
        %1230 = vmatprep.mubr.f32.mxu0 0.0
        %1231 = vmatmul.mubr.f32.gmra.mrb[0].mxu0 %v1115
        %v1232 = vpop.f32.mrb[0].mxu0
        %v1233 = vadd.f32 %v901, %v1232
        %v1234 = vpop.f32.mrb[0].mxu0
        %1235 = vmatprep.mubr.f32.mxu0 0.0
        %1236 = vmatmul.mubr.f32.gmra.mrb[0].mxu0 %v1118
        %v1237 = vpop.f32.mrb[0].mxu0
        %v1238 = vadd.f32 %v902, %v1237
        %v1239 = vpop.f32.mrb[0].mxu0
        %1240 = vdwg.mxu0
        %v1241 = vsel %vm461, %v1034, -inf
        %1242 = vmax.xlane.f32.xlu0 %v1241
        %v1243 = vpop.xlane.xlu0 %1242
        %v1244 = vsel %vm461, %v1039, -inf
        %1245 = vmax.xlane.f32.xlu0 %v1244
        %v1246 = vpop.xlane.xlu0 %1245
        %v1247 = vsel %vm461, %v1044, -inf
        %1248 = vmax.xlane.f32.xlu0 %v1247
        %v1249 = vpop.xlane.xlu0 %1248
        %v1250 = vsel %vm461, %v1049, -inf
        %1251 = vmax.xlane.f32.xlu0 %v1250
        %v1252 = vpop.xlane.xlu0 %1251
        %v1253 = vsel %vm461, %v1054, -inf
        %1254 = vmax.xlane.f32.xlu0 %v1253
        %v1255 = vpop.xlane.xlu0 %1254
        %v1256 = vsel %vm461, %v1059, -inf
        %1257 = vmax.xlane.f32.xlu0 %v1256
        %v1258 = vpop.xlane.xlu0 %1257
        %v1259 = vsel %vm461, %v1064, -inf
        %1260 = vmax.xlane.f32.xlu0 %v1259
        %v1261 = vpop.xlane.xlu0 %1260
        %v1262 = vsel %vm461, %v1069, -inf
        %1263 = vmax.xlane.f32.xlu0 %v1262
        %v1264 = vpop.xlane.xlu0 %1263
        %v1265 = vsel %vm461, %v1203, -inf
        %1266 = vmax.xlane.f32.xlu0 %v1265
        %v1267 = vpop.xlane.xlu0 %1266
        %v1268 = vsel %vm461, %v1208, -inf
        %1269 = vmax.xlane.f32.xlu0 %v1268
        %v1270 = vpop.xlane.xlu0 %1269
        %v1271 = vsel %vm461, %v1213, -inf
        %1272 = vmax.xlane.f32.xlu0 %v1271
        %v1273 = vpop.xlane.xlu0 %1272
        %v1274 = vsel %vm461, %v1218, -inf
        %1275 = vmax.xlane.f32.xlu0 %v1274
        %v1276 = vpop.xlane.xlu0 %1275
        %v1277 = vsel %vm461, %v1223, -inf
        %1278 = vmax.xlane.f32.xlu0 %v1277
        %v1279 = vpop.xlane.xlu0 %1278
        %v1280 = vsel %vm461, %v1228, -inf
        %1281 = vmax.xlane.f32.xlu0 %v1280
        %v1282 = vpop.xlane.xlu0 %1281
        %v1283 = vsel %vm461, %v1233, -inf
        %1284 = vmax.xlane.f32.xlu0 %v1283
        %v1285 = vpop.xlane.xlu0 %1284
        %v1286 = vsel %vm461, %v1238, -inf
        %1287 = vmax.xlane.f32.xlu0 %v1286
        %v1288 = vpop.xlane.xlu0 %1287
        %v1289 = vsub.f32 %v1034, %v1243
        %v1290 = vsub.f32 %v1039, %v1246
        %v1291 = vsub.f32 %v1044, %v1249
        %v1292 = vsub.f32 %v1049, %v1252
        %v1293 = vsub.f32 %v1054, %v1255
        %v1294 = vsub.f32 %v1059, %v1258
        %v1295 = vsub.f32 %v1064, %v1261
        %v1296 = vsub.f32 %v1069, %v1264
        %v1297 = vsub.f32 %v1203, %v1267
        %v1298 = vsub.f32 %v1208, %v1270
        %v1299 = vsub.f32 %v1213, %v1273
        %v1300 = vsub.f32 %v1218, %v1276
        %v1301 = vsub.f32 %v1223, %v1279
        %v1302 = vsub.f32 %v1228, %v1282
        %v1303 = vsub.f32 %v1233, %v1285
        %v1304 = vsub.f32 %v1238, %v1288
        %v1305 = vmul.f32 %v1289, 1.442695
        %v1306 = vpow.pop %v1305
        %v1307 = vmul.f32 %v1290, 1.442695
        %v1308 = vpow.pop %v1307
        %v1309 = vmul.f32 %v1291, 1.442695
        %v1310 = vpow.pop %v1309
        %v1311 = vmul.f32 %v1292, 1.442695
        %v1312 = vpow.pop %v1311
        %v1313 = vmul.f32 %v1293, 1.442695
        %v1314 = vpow.pop %v1313
        %v1315 = vmul.f32 %v1294, 1.442695
        %v1316 = vpow.pop %v1315
        %v1317 = vmul.f32 %v1295, 1.442695
        %v1318 = vpow.pop %v1317
        %v1319 = vmul.f32 %v1296, 1.442695
        %v1320 = vpow.pop %v1319
        %v1321 = vmul.f32 %v1297, 1.442695
        %v1322 = vpow.pop %v1321
        %v1323 = vmul.f32 %v1298, 1.442695
        %v1324 = vpow.pop %v1323
        %v1325 = vmul.f32 %v1299, 1.442695
        %v1326 = vpow.pop %v1325
        %v1327 = vmul.f32 %v1300, 1.442695
        %v1328 = vpow.pop %v1327
        %v1329 = vmul.f32 %v1301, 1.442695
        %v1330 = vpow.pop %v1329
        %v1331 = vmul.f32 %v1302, 1.442695
        %v1332 = vpow.pop %v1331
        %v1333 = vmul.f32 %v1303, 1.442695
        %v1334 = vpow.pop %v1333
        %v1335 = vmul.f32 %v1304, 1.442695
        %v1336 = vpow.pop %v1335
        %v1337 = vsel %vm461, %v1306, 0.0
        %1338 = vadd.xlane.f32.xlu0 %v1337
        %v1339 = vpop.xlane.xlu0 %1338
        %v1340 = vsel %vm461, %v1308, 0.0
        %1341 = vadd.xlane.f32.xlu0 %v1340
        %v1342 = vpop.xlane.xlu0 %1341
        %v1343 = vsel %vm461, %v1310, 0.0
        %1344 = vadd.xlane.f32.xlu0 %v1343
        %v1345 = vpop.xlane.xlu0 %1344
        %v1346 = vsel %vm461, %v1312, 0.0
        %1347 = vadd.xlane.f32.xlu0 %v1346
        %v1348 = vpop.xlane.xlu0 %1347
        %v1349 = vsel %vm461, %v1314, 0.0
        %1350 = vadd.xlane.f32.xlu0 %v1349
        %v1351 = vpop.xlane.xlu0 %1350
        %v1352 = vsel %vm461, %v1316, 0.0
        %1353 = vadd.xlane.f32.xlu0 %v1352
        %v1354 = vpop.xlane.xlu0 %1353
        %v1355 = vsel %vm461, %v1318, 0.0
        %1356 = vadd.xlane.f32.xlu0 %v1355
        %v1357 = vpop.xlane.xlu0 %1356
        %v1358 = vsel %vm461, %v1320, 0.0
        %1359 = vadd.xlane.f32.xlu0 %v1358
        %v1360 = vpop.xlane.xlu0 %1359
        %v1361 = vsel %vm461, %v1322, 0.0
        %1362 = vadd.xlane.f32.xlu0 %v1361
        %v1363 = vpop.xlane.xlu0 %1362
        %v1364 = vsel %vm461, %v1324, 0.0
        %1365 = vadd.xlane.f32.xlu0 %v1364
        %v1366 = vpop.xlane.xlu0 %1365
        %v1367 = vsel %vm461, %v1326, 0.0
        %1368 = vadd.xlane.f32.xlu0 %v1367
        %v1369 = vpop.xlane.xlu0 %1368
        %v1370 = vsel %vm461, %v1328, 0.0
        %1371 = vadd.xlane.f32.xlu0 %v1370
        %v1372 = vpop.xlane.xlu0 %1371
        %v1373 = vsel %vm461, %v1330, 0.0
        %1374 = vadd.xlane.f32.xlu0 %v1373
        %v1375 = vpop.xlane.xlu0 %1374
        %v1376 = vsel %vm461, %v1332, 0.0
        %1377 = vadd.xlane.f32.xlu0 %v1376
        %v1378 = vpop.xlane.xlu0 %1377
        %v1379 = vsel %vm461, %v1334, 0.0
        %1380 = vadd.xlane.f32.xlu0 %v1379
        %v1381 = vpop.xlane.xlu0 %1380
        %v1382 = vsel %vm461, %v1336, 0.0
        %1383 = vadd.xlane.f32.xlu0 %v1382
        %v1384 = vpop.xlane.xlu0 %1383
        %v1385 = vrcp.pop %v1339
        %v1386 = vrcp.pop %v1342
        %v1387 = vrcp.pop %v1345
        %v1388 = vrcp.pop %v1348
        %v1389 = vrcp.pop %v1351
        %v1390 = vrcp.pop %v1354
        %v1391 = vrcp.pop %v1357
        %v1392 = vrcp.pop %v1360
        %v1393 = vrcp.pop %v1363
        %v1394 = vrcp.pop %v1366
        %v1395 = vrcp.pop %v1369
        %v1396 = vrcp.pop %v1372
        %v1397 = vrcp.pop %v1375
        %v1398 = vrcp.pop %v1378
        %v1399 = vrcp.pop %v1381
        %v1400 = vrcp.pop %v1384
        %v1401 = vmul.f32 %v1306, %v1385
        %v1402 = vmul.f32 %v1308, %v1386
        %v1403 = vmul.f32 %v1310, %v1387
        %v1404 = vmul.f32 %v1312, %v1388
        %v1405 = vmul.f32 %v1314, %v1389
        %v1406 = vmul.f32 %v1316, %v1390
        %v1407 = vmul.f32 %v1318, %v1391
        %v1408 = vmul.f32 %v1320, %v1392
        %v1409 = vmul.f32 %v1322, %v1393
        %v1410 = vmul.f32 %v1324, %v1394
        %v1411 = vmul.f32 %v1326, %v1395
        %v1412 = vmul.f32 %v1328, %v1396
        %v1413 = vmul.f32 %v1330, %v1397
        %v1414 = vmul.f32 %v1332, %v1398
        %v1415 = vmul.f32 %v1334, %v1399
        %v1416 = vmul.f32 %v1336, %v1400
        %v1417 = vpack.c.bf16 %v1402, %v1401
        %v1418 = vpack.c.bf16 %v1404, %v1403
        %v1419 = vpack.c.bf16 %v1406, %v1405
        %v1420 = vpack.c.bf16 %v1408, %v1407
        %v1421 = vpack.c.bf16 %v1410, %v1409
        %v1422 = vpack.c.bf16 %v1412, %v1411
        %v1423 = vpack.c.bf16 %v1414, %v1413
        %v1424 = vpack.c.bf16 %v1416, %v1415
        %v1425 = vpack.c.bf16 %v527, %v523
        %v1426 = vpack.c.bf16 %v537, %v533
        %v1427 = vpack.c.bf16 %v547, %v543
        %v1428 = vpack.c.bf16 %v557, %v553
        %v1429 = vpack.c.bf16 %v567, %v563
        %v1430 = vpack.c.bf16 %v577, %v573
        %v1431 = vpack.c.bf16 %v587, %v583
        %v1432 = vpack.c.bf16 %v597, %v593
        %v1434 = vsel %vm461, %v1417, 0
        %v1437 = vsel %vm461, %v1418, 0
        %v1440 = vsel %vm461, %v1419, 0
        %v1443 = vsel %vm461, %v1420, 0
        %1445 = vmatprep.subr.bf16.mxu0 0
        %1446 = vmatpush1.bf16.msra.mxu0 %v1425
        %1447 = vmatprep.subr.bf16.mxu0 0
        %1448 = vmatpush1.bf16.msra.mxu0 %v1426
        %1449 = vmatprep.subr.bf16.mxu0 0
        %1450 = vmatpush1.bf16.msra.mxu0 %v1427
        %1451 = vmatprep.subr.bf16.mxu0 0
        %1452 = vmatpush1.bf16.msra.mxu0 %v1428
        %1453 = vmatprep.subr.bf16.mxu0 0
        %1454 = vmatpush1.bf16.msra.mxu0 0
        %1455 = vmatprep.subr.bf16.mxu0 0
        %1456 = vmatpush1.bf16.msra.mxu0 0
        %1457 = vmatprep.subr.bf16.mxu0 0
        %1458 = vmatpush1.bf16.msra.mxu0 0
        %1459 = vmatprep.subr.bf16.mxu0 0
        %1460 = vmatpush1.bf16.msra.mxu0 0
        %1461 = vmatprep.subr.bf16.mxu0 0
        %1462 = vmatpush1.bf16.msra.mxu0 0
        %1463 = vmatprep.subr.bf16.mxu0 0
        %1464 = vmatpush1.bf16.msra.mxu0 0
        %1465 = vmatprep.subr.bf16.mxu0 0
        %1466 = vmatpush1.bf16.msra.mxu0 0
        %1467 = vmatprep.subr.bf16.mxu0 0
        %1468 = vmatpush1.bf16.msra.mxu0 0
        %1469 = vmatprep.subr.bf16.mxu0 0
        %1470 = vmatpush1.bf16.msra.mxu0 0
        %1471 = vmatprep.subr.bf16.mxu0 0
        %1472 = vmatpush1.bf16.msra.mxu0 0
        %1473 = vmatprep.subr.bf16.mxu0 0
        %1474 = vmatpush1.bf16.msra.mxu0 0
        %1475 = vmatprep.subr.bf16.mxu0 0
        %1476 = vmatpush1.bf16.msra.mxu0 0
        %1477 = vmatprep.mubr.bf16.mxu0 0
        %1478 = vmatmul.mubr.bf16.gmra.mrb[0].mxu0 %v1434
        %v1479 = vpop.f32.mrb[0].mxu0
        %v1480 = vadd.f32 0.0, %v1479
        %v1481 = vpop.f32.mrb[0].mxu0
        %v1482 = vpop.f32.mrb[0].mxu0
        %v1483 = vadd.f32 0.0, %v1482
        %v1484 = vpop.f32.mrb[0].mxu0
        %1485 = vmatprep.mubr.bf16.mxu0 0
        %1486 = vmatmul.mubr.bf16.gmra.mrb[0].mxu0 %v1437
        %v1487 = vpop.f32.mrb[0].mxu0
        %v1488 = vadd.f32 0.0, %v1487
        %v1489 = vpop.f32.mrb[0].mxu0
        %v1490 = vpop.f32.mrb[0].mxu0
        %v1491 = vadd.f32 0.0, %v1490
        %v1492 = vpop.f32.mrb[0].mxu0
        %1493 = vmatprep.mubr.bf16.mxu0 0
        %1494 = vmatmul.mubr.bf16.gmra.mrb[0].mxu0 %v1440
        %v1495 = vpop.f32.mrb[0].mxu0
        %v1496 = vadd.f32 0.0, %v1495
        %v1497 = vpop.f32.mrb[0].mxu0
        %v1498 = vpop.f32.mrb[0].mxu0
        %v1499 = vadd.f32 0.0, %v1498
        %v1500 = vpop.f32.mrb[0].mxu0
        %1501 = vmatprep.mubr.bf16.mxu0 0
        %1502 = vmatmul.mubr.bf16.gmra.mrb[0].mxu0 %v1443
        %v1503 = vpop.f32.mrb[0].mxu0
        %v1504 = vadd.f32 0.0, %v1503
        %v1505 = vpop.f32.mrb[0].mxu0
        %v1506 = vpop.f32.mrb[0].mxu0
        %v1507 = vadd.f32 0.0, %v1506
        %v1508 = vpop.f32.mrb[0].mxu0
        %1509 = vdwg.mxu0
        %v1511 = vsel %vm461, %v1421, 0
        %v1514 = vsel %vm461, %v1422, 0
        %v1517 = vsel %vm461, %v1423, 0
        %v1520 = vsel %vm461, %v1424, 0
        %1522 = vmatprep.subr.bf16.mxu0 0
        %1523 = vmatpush1.bf16.msra.mxu0 %v1429
        %1524 = vmatprep.subr.bf16.mxu0 0
        %1525 = vmatpush1.bf16.msra.mxu0 %v1430
        %1526 = vmatprep.subr.bf16.mxu0 0
        %1527 = vmatpush1.bf16.msra.mxu0 %v1431
        %1528 = vmatprep.subr.bf16.mxu0 0
        %1529 = vmatpush1.bf16.msra.mxu0 %v1432
        %1530 = vmatprep.subr.bf16.mxu0 0
        %1531 = vmatpush1.bf16.msra.mxu0 0
        %1532 = vmatprep.subr.bf16.mxu0 0
        %1533 = vmatpush1.bf16.msra.mxu0 0
        %1534 = vmatprep.subr.bf16.mxu0 0
        %1535 = vmatpush1.bf16.msra.mxu0 0
        %1536 = vmatprep.subr.bf16.mxu0 0
        %1537 = vmatpush1.bf16.msra.mxu0 0
        %1538 = vmatprep.subr.bf16.mxu0 0
        %1539 = vmatpush1.bf16.msra.mxu0 0
        %1540 = vmatprep.subr.bf16.mxu0 0
        %1541 = vmatpush1.bf16.msra.mxu0 0
        %1542 = vmatprep.subr.bf16.mxu0 0
        %1543 = vmatpush1.bf16.msra.mxu0 0
        %1544 = vmatprep.subr.bf16.mxu0 0
        %1545 = vmatpush1.bf16.msra.mxu0 0
        %1546 = vmatprep.subr.bf16.mxu0 0
        %1547 = vmatpush1.bf16.msra.mxu0 0
        %1548 = vmatprep.subr.bf16.mxu0 0
        %1549 = vmatpush1.bf16.msra.mxu0 0
        %1550 = vmatprep.subr.bf16.mxu0 0
        %1551 = vmatpush1.bf16.msra.mxu0 0
        %1552 = vmatprep.subr.bf16.mxu0 0
        %1553 = vmatpush1.bf16.msra.mxu0 0
        %1554 = vmatprep.mubr.bf16.mxu0 0
        %1555 = vmatmul.mubr.bf16.gmra.mrb[0].mxu0 %v1511
        %v1556 = vpop.f32.mrb[0].mxu0
        %v1557 = vadd.f32 0.0, %v1556
        %v1558 = vpop.f32.mrb[0].mxu0
        %v1559 = vpop.f32.mrb[0].mxu0
        %v1560 = vadd.f32 0.0, %v1559
        %v1561 = vpop.f32.mrb[0].mxu0
        %1562 = vmatprep.mubr.bf16.mxu0 0
        %1563 = vmatmul.mubr.bf16.gmra.mrb[0].mxu0 %v1514
        %v1564 = vpop.f32.mrb[0].mxu0
        %v1565 = vadd.f32 0.0, %v1564
        %v1566 = vpop.f32.mrb[0].mxu0
        %v1567 = vpop.f32.mrb[0].mxu0
        %v1568 = vadd.f32 0.0, %v1567
        %v1569 = vpop.f32.mrb[0].mxu0
        %1570 = vmatprep.mubr.bf16.mxu0 0
        %1571 = vmatmul.mubr.bf16.gmra.mrb[0].mxu0 %v1517
        %v1572 = vpop.f32.mrb[0].mxu0
        %v1573 = vadd.f32 0.0, %v1572
        %v1574 = vpop.f32.mrb[0].mxu0
        %v1575 = vpop.f32.mrb[0].mxu0
        %v1576 = vadd.f32 0.0, %v1575
        %v1577 = vpop.f32.mrb[0].mxu0
        %1578 = vmatprep.mubr.bf16.mxu0 0
        %1579 = vmatmul.mubr.bf16.gmra.mrb[0].mxu0 %v1520
        %v1580 = vpop.f32.mrb[0].mxu0
        %v1581 = vadd.f32 0.0, %v1580
        %v1582 = vpop.f32.mrb[0].mxu0
        %v1583 = vpop.f32.mrb[0].mxu0
        %v1584 = vadd.f32 0.0, %v1583
        %v1585 = vpop.f32.mrb[0].mxu0
        %1586 = vdwg.mxu0
        %v1587 = vpack.c.bf16 %v1483, %v1480
        %v1588 = vpack.c.bf16 %v1491, %v1488
        %v1589 = vpack.c.bf16 %v1499, %v1496
        %v1590 = vpack.c.bf16 %v1507, %v1504
        %v1591 = vpack.c.bf16 %v1560, %v1557
        %v1592 = vpack.c.bf16 %v1568, %v1565
        %v1593 = vpack.c.bf16 %v1576, %v1573
        %v1594 = vpack.c.bf16 %v1584, %v1581
        %1595 = vst.msk [vmem:[#allocation2] sm:$0xff] %vm615, %v1587
        %1596 = vst.msk [vmem:[#allocation2 + $0x8] sm:$0xff] %vm615, %v1588
        %1597 = vst.msk [vmem:[#allocation2 + $0x10] sm:$0xff] %vm615, %v1589
        %1598 = vst.msk [vmem:[#allocation2 + $0x18] sm:$0xff] %vm615, %v1590
        %1599 = vst.msk [vmem:[#allocation2 + $0x20] sm:$0xff] %vm615, %v1591
        %1600 = vst.msk [vmem:[#allocation2 + $0x28] sm:$0xff] %vm615, %v1592
        %1601 = vst.msk [vmem:[#allocation2 + $0x30] sm:$0xff] %vm615, %v1593
        %1602 = vst.msk [vmem:[#allocation2 + $0x38] sm:$0xff] %vm615, %v1594
        %1603 = vrot.lane.b32.xlu0 %v599, 96
        %v1604 = vpop.permute.xlu0 %1603
        %1605 = vrot.lane.b32.xlu0 %v600, 96
        %v1606 = vpop.permute.xlu0 %1605
        %1607 = vrot.lane.b32.xlu0 %v601, 96
        %v1608 = vpop.permute.xlu0 %1607
        %1609 = vrot.lane.b32.xlu0 %v602, 96
        %v1610 = vpop.permute.xlu0 %1609
        %1611 = vrot.lane.b32.xlu0 %v603, 96
        %v1612 = vpop.permute.xlu0 %1611
        %1613 = vrot.lane.b32.xlu0 %v604, 96
        %v1614 = vpop.permute.xlu0 %1613
        %1615 = vrot.lane.b32.xlu0 %v605, 96
        %v1616 = vpop.permute.xlu0 %1615
        %1617 = vrot.lane.b32.xlu0 %v606, 96
        %v1618 = vpop.permute.xlu0 %1617
        %1619 = vrot.lane.b32.xlu0 %v607, 96
        %v1620 = vpop.permute.xlu0 %1619
        %1621 = vrot.lane.b32.xlu0 %v608, 96
        %v1622 = vpop.permute.xlu0 %1621
        %1623 = vrot.lane.b32.xlu0 %v609, 96
        %v1624 = vpop.permute.xlu0 %1623
        %1625 = vrot.lane.b32.xlu0 %v610, 96
        %v1626 = vpop.permute.xlu0 %1625
        %1627 = vrot.lane.b32.xlu0 %v611, 96
        %v1628 = vpop.permute.xlu0 %1627
        %1629 = vrot.lane.b32.xlu0 %v612, 96
        %v1630 = vpop.permute.xlu0 %1629
        %1631 = vrot.lane.b32.xlu0 %v613, 96
        %v1632 = vpop.permute.xlu0 %1631
        %1633 = vrot.lane.b32.xlu0 %v614, 96
        %v1634 = vpop.permute.xlu0 %1633
        %v1651 = vsel %vm615, %v1604, 0.0
        %1652 = vadd.xlane.f32.xlu0 %v1651
        %v1653 = vpop.xlane.xlu0 %1652
        %v1654 = vsel %vm615, %v1606, 0.0
        %1655 = vadd.xlane.f32.xlu0 %v1654
        %v1656 = vpop.xlane.xlu0 %1655
        %v1657 = vsel %vm615, %v1608, 0.0
        %1658 = vadd.xlane.f32.xlu0 %v1657
        %v1659 = vpop.xlane.xlu0 %1658
        %v1660 = vsel %vm615, %v1610, 0.0
        %1661 = vadd.xlane.f32.xlu0 %v1660
        %v1662 = vpop.xlane.xlu0 %1661
        %v1663 = vsel %vm615, %v1612, 0.0
        %1664 = vadd.xlane.f32.xlu0 %v1663
        %v1665 = vpop.xlane.xlu0 %1664
        %v1666 = vsel %vm615, %v1614, 0.0
        %1667 = vadd.xlane.f32.xlu0 %v1666
        %v1668 = vpop.xlane.xlu0 %1667
        %v1669 = vsel %vm615, %v1616, 0.0
        %1670 = vadd.xlane.f32.xlu0 %v1669
        %v1671 = vpop.xlane.xlu0 %1670
        %v1672 = vsel %vm615, %v1618, 0.0
        %1673 = vadd.xlane.f32.xlu0 %v1672
        %v1674 = vpop.xlane.xlu0 %1673
        %v1675 = vsel %vm615, %v1620, 0.0
        %1676 = vadd.xlane.f32.xlu0 %v1675
        %v1677 = vpop.xlane.xlu0 %1676
        %v1678 = vsel %vm615, %v1622, 0.0
        %1679 = vadd.xlane.f32.xlu0 %v1678
        %v1680 = vpop.xlane.xlu0 %1679
        %v1681 = vsel %vm615, %v1624, 0.0
        %1682 = vadd.xlane.f32.xlu0 %v1681
        %v1683 = vpop.xlane.xlu0 %1682
        %v1684 = vsel %vm615, %v1626, 0.0
        %1685 = vadd.xlane.f32.xlu0 %v1684
        %v1686 = vpop.xlane.xlu0 %1685
        %v1687 = vsel %vm615, %v1628, 0.0
        %1688 = vadd.xlane.f32.xlu0 %v1687
        %v1689 = vpop.xlane.xlu0 %1688
        %v1690 = vsel %vm615, %v1630, 0.0
        %1691 = vadd.xlane.f32.xlu0 %v1690
        %v1692 = vpop.xlane.xlu0 %1691
        %v1693 = vsel %vm615, %v1632, 0.0
        %1694 = vadd.xlane.f32.xlu0 %v1693
        %v1695 = vpop.xlane.xlu0 %1694
        %v1696 = vsel %vm615, %v1634, 0.0
        %1697 = vadd.xlane.f32.xlu0 %v1696
        %v1698 = vpop.xlane.xlu0 %1697
        %v1699 = vmax.f32 %v1653, 1e-24
        %v1700 = vmax.f32 %v1656, 1e-24
        %v1701 = vmax.f32 %v1659, 1e-24
        %v1702 = vmax.f32 %v1662, 1e-24
        %v1703 = vmax.f32 %v1665, 1e-24
        %v1704 = vmax.f32 %v1668, 1e-24
        %v1705 = vmax.f32 %v1671, 1e-24
        %v1706 = vmax.f32 %v1674, 1e-24
        %v1707 = vmax.f32 %v1677, 1e-24
        %v1708 = vmax.f32 %v1680, 1e-24
        %v1709 = vmax.f32 %v1683, 1e-24
        %v1710 = vmax.f32 %v1686, 1e-24
        %v1711 = vmax.f32 %v1689, 1e-24
        %v1712 = vmax.f32 %v1692, 1e-24
        %v1713 = vmax.f32 %v1695, 1e-24
        %v1714 = vmax.f32 %v1698, 1e-24
        %v1715 = vrsqrt.pop %v1699
        %v1716 = vrsqrt.pop %v1700
        %v1717 = vrsqrt.pop %v1701
        %v1718 = vrsqrt.pop %v1702
        %v1719 = vrsqrt.pop %v1703
        %v1720 = vrsqrt.pop %v1704
        %v1721 = vrsqrt.pop %v1705
        %v1722 = vrsqrt.pop %v1706
        %v1723 = vrsqrt.pop %v1707
        %v1724 = vrsqrt.pop %v1708
        %v1725 = vrsqrt.pop %v1709
        %v1726 = vrsqrt.pop %v1710
        %v1727 = vrsqrt.pop %v1711
        %v1728 = vrsqrt.pop %v1712
        %v1729 = vrsqrt.pop %v1713
        %v1730 = vrsqrt.pop %v1714
        %v1731 = vmul.f32 %v521, %v1715
        %v1732 = vmul.f32 %v525, %v1716
        %v1733 = vmul.f32 %v531, %v1717
        %v1734 = vmul.f32 %v535, %v1718
        %v1735 = vmul.f32 %v541, %v1719
        %v1736 = vmul.f32 %v545, %v1720
        %v1737 = vmul.f32 %v551, %v1721
        %v1738 = vmul.f32 %v555, %v1722
        %v1739 = vmul.f32 %v561, %v1723
        %v1740 = vmul.f32 %v565, %v1724
        %v1741 = vmul.f32 %v571, %v1725
        %v1742 = vmul.f32 %v575, %v1726
        %v1743 = vmul.f32 %v581, %v1727
        %v1744 = vmul.f32 %v585, %v1728
        %v1745 = vmul.f32 %v591, %v1729
        %v1746 = vmul.f32 %v595, %v1730
        %v1747 = vld [vmem:[%s3] sm:$0x1]
        %v1749 = vlaneseq
        %v1750 = vshrl.u32 %v1749, 7
        %v1751 = vsub.s32 0, %v1750
        %v1752 = vrot.slane %v1747, %v1751
        %v1754 = vmul.f32 %v1731, %v1752
        %v1755 = vmul.f32 %v1732, %v1752
        %v1756 = vmul.f32 %v1733, %v1752
        %v1757 = vmul.f32 %v1734, %v1752
        %v1758 = vmul.f32 %v1735, %v1752
        %v1759 = vmul.f32 %v1736, %v1752
        %v1760 = vmul.f32 %v1737, %v1752
        %v1761 = vmul.f32 %v1738, %v1752
        %v1762 = vmul.f32 %v1739, %v1752
        %v1763 = vmul.f32 %v1740, %v1752
        %v1764 = vmul.f32 %v1741, %v1752
        %v1765 = vmul.f32 %v1742, %v1752
        %v1766 = vmul.f32 %v1743, %v1752
        %v1767 = vmul.f32 %v1744, %v1752
        %v1768 = vmul.f32 %v1745, %v1752
        %v1769 = vmul.f32 %v1746, %v1752
        %1770 = vrot.lane.b32.xlu0 %v599, 32
        %v1771 = vpop.permute.xlu0 %1770
        %1772 = vrot.lane.b32.xlu0 %v600, 32
        %v1773 = vpop.permute.xlu0 %1772
        %1774 = vrot.lane.b32.xlu0 %v601, 32
        %v1775 = vpop.permute.xlu0 %1774
        %1776 = vrot.lane.b32.xlu0 %v602, 32
        %v1777 = vpop.permute.xlu0 %1776
        %1778 = vrot.lane.b32.xlu0 %v603, 32
        %v1779 = vpop.permute.xlu0 %1778
        %1780 = vrot.lane.b32.xlu0 %v604, 32
        %v1781 = vpop.permute.xlu0 %1780
        %1782 = vrot.lane.b32.xlu0 %v605, 32
        %v1783 = vpop.permute.xlu0 %1782
        %1784 = vrot.lane.b32.xlu0 %v606, 32
        %v1785 = vpop.permute.xlu0 %1784
        %1786 = vrot.lane.b32.xlu0 %v607, 32
        %v1787 = vpop.permute.xlu0 %1786
        %1788 = vrot.lane.b32.xlu0 %v608, 32
        %v1789 = vpop.permute.xlu0 %1788
        %1790 = vrot.lane.b32.xlu0 %v609, 32
        %v1791 = vpop.permute.xlu0 %1790
        %1792 = vrot.lane.b32.xlu0 %v610, 32
        %v1793 = vpop.permute.xlu0 %1792
        %1794 = vrot.lane.b32.xlu0 %v611, 32
        %v1795 = vpop.permute.xlu0 %1794
        %1796 = vrot.lane.b32.xlu0 %v612, 32
        %v1797 = vpop.permute.xlu0 %1796
        %1798 = vrot.lane.b32.xlu0 %v613, 32
        %v1799 = vpop.permute.xlu0 %1798
        %1800 = vrot.lane.b32.xlu0 %v614, 32
        %v1801 = vpop.permute.xlu0 %1800
        %v1818 = vsel %vm615, %v1771, 0.0
        %1819 = vadd.xlane.f32.xlu0 %v1818
        %v1820 = vpop.xlane.xlu0 %1819
        %v1821 = vsel %vm615, %v1773, 0.0
        %1822 = vadd.xlane.f32.xlu0 %v1821
        %v1823 = vpop.xlane.xlu0 %1822
        %v1824 = vsel %vm615, %v1775, 0.0
        %1825 = vadd.xlane.f32.xlu0 %v1824
        %v1826 = vpop.xlane.xlu0 %1825
        %v1827 = vsel %vm615, %v1777, 0.0
        %1828 = vadd.xlane.f32.xlu0 %v1827
        %v1829 = vpop.xlane.xlu0 %1828
        %v1830 = vsel %vm615, %v1779, 0.0
        %1831 = vadd.xlane.f32.xlu0 %v1830
        %v1832 = vpop.xlane.xlu0 %1831
        %v1833 = vsel %vm615, %v1781, 0.0
        %1834 = vadd.xlane.f32.xlu0 %v1833
        %v1835 = vpop.xlane.xlu0 %1834
        %v1836 = vsel %vm615, %v1783, 0.0
        %1837 = vadd.xlane.f32.xlu0 %v1836
        %v1838 = vpop.xlane.xlu0 %1837
        %v1839 = vsel %vm615, %v1785, 0.0
        %1840 = vadd.xlane.f32.xlu0 %v1839
        %v1841 = vpop.xlane.xlu0 %1840
        %v1842 = vsel %vm615, %v1787, 0.0
        %1843 = vadd.xlane.f32.xlu0 %v1842
        %v1844 = vpop.xlane.xlu0 %1843
        %v1845 = vsel %vm615, %v1789, 0.0
        %1846 = vadd.xlane.f32.xlu0 %v1845
        %v1847 = vpop.xlane.xlu0 %1846
        %v1848 = vsel %vm615, %v1791, 0.0
        %1849 = vadd.xlane.f32.xlu0 %v1848
        %v1850 = vpop.xlane.xlu0 %1849
        %v1851 = vsel %vm615, %v1793, 0.0
        %1852 = vadd.xlane.f32.xlu0 %v1851
        %v1853 = vpop.xlane.xlu0 %1852
        %v1854 = vsel %vm615, %v1795, 0.0
        %1855 = vadd.xlane.f32.xlu0 %v1854
        %v1856 = vpop.xlane.xlu0 %1855
        %v1857 = vsel %vm615, %v1797, 0.0
        %1858 = vadd.xlane.f32.xlu0 %v1857
        %v1859 = vpop.xlane.xlu0 %1858
        %v1860 = vsel %vm615, %v1799, 0.0
        %1861 = vadd.xlane.f32.xlu0 %v1860
        %v1862 = vpop.xlane.xlu0 %1861
        %v1863 = vsel %vm615, %v1801, 0.0
        %1864 = vadd.xlane.f32.xlu0 %v1863
        %v1865 = vpop.xlane.xlu0 %1864
        %v1866 = vmax.f32 %v1820, 1e-24
        %v1867 = vmax.f32 %v1823, 1e-24
        %v1868 = vmax.f32 %v1826, 1e-24
        %v1869 = vmax.f32 %v1829, 1e-24
        %v1870 = vmax.f32 %v1832, 1e-24
        %v1871 = vmax.f32 %v1835, 1e-24
        %v1872 = vmax.f32 %v1838, 1e-24
        %v1873 = vmax.f32 %v1841, 1e-24
        %v1874 = vmax.f32 %v1844, 1e-24
        %v1875 = vmax.f32 %v1847, 1e-24
        %v1876 = vmax.f32 %v1850, 1e-24
        %v1877 = vmax.f32 %v1853, 1e-24
        %v1878 = vmax.f32 %v1856, 1e-24
        %v1879 = vmax.f32 %v1859, 1e-24
        %v1880 = vmax.f32 %v1862, 1e-24
        %v1881 = vmax.f32 %v1865, 1e-24
        %v1882 = vrsqrt.pop %v1866
        %v1883 = vrsqrt.pop %v1867
        %v1884 = vrsqrt.pop %v1868
        %v1885 = vrsqrt.pop %v1869
        %v1886 = vrsqrt.pop %v1870
        %v1887 = vrsqrt.pop %v1871
        %v1888 = vrsqrt.pop %v1872
        %v1889 = vrsqrt.pop %v1873
        %v1890 = vrsqrt.pop %v1874
        %v1891 = vrsqrt.pop %v1875
        %v1892 = vrsqrt.pop %v1876
        %v1893 = vrsqrt.pop %v1877
        %v1894 = vrsqrt.pop %v1878
        %v1895 = vrsqrt.pop %v1879
        %v1896 = vrsqrt.pop %v1880
        %v1897 = vrsqrt.pop %v1881
        %v1898 = vmul.f32 %v521, %v1882
        %v1899 = vmul.f32 %v525, %v1883
        %v1900 = vmul.f32 %v531, %v1884
        %v1901 = vmul.f32 %v535, %v1885
        %v1902 = vmul.f32 %v541, %v1886
        %v1903 = vmul.f32 %v545, %v1887
        %v1904 = vmul.f32 %v551, %v1888
        %v1905 = vmul.f32 %v555, %v1889
        %v1906 = vmul.f32 %v561, %v1890
        %v1907 = vmul.f32 %v565, %v1891
        %v1908 = vmul.f32 %v571, %v1892
        %v1909 = vmul.f32 %v575, %v1893
        %v1910 = vmul.f32 %v581, %v1894
        %v1911 = vmul.f32 %v585, %v1895
        %v1912 = vmul.f32 %v591, %v1896
        %v1913 = vmul.f32 %v595, %v1897
        %s1914 = scalar_lea.vmem [#allocation8], 64
        %v1915 = vld [vmem:[%s1914] sm:$0xff]
        %v1916 = vld [vmem:[%s1914 + $0x8] sm:$0xff]
        %v1917 = vld [vmem:[%s1914 + $0x10] sm:$0xff]
        %v1918 = vld [vmem:[%s1914 + $0x18] sm:$0xff]
        %v1919 = vld [vmem:[%s1914 + $0x20] sm:$0xff]
        %v1920 = vld [vmem:[%s1914 + $0x28] sm:$0xff]
        %v1921 = vld [vmem:[%s1914 + $0x30] sm:$0xff]
        %v1922 = vld [vmem:[%s1914 + $0x38] sm:$0xff]
        %1931 = vrot.lane.b32.xlu0 %v1754, 96
        %v1932 = vpop.permute.xlu0 %1931
        %1933 = vrot.lane.b32.xlu0 %v1755, 96
        %v1934 = vpop.permute.xlu0 %1933
        %1935 = vrot.lane.b32.xlu0 %v1756, 96
        %v1936 = vpop.permute.xlu0 %1935
        %1937 = vrot.lane.b32.xlu0 %v1757, 96
        %v1938 = vpop.permute.xlu0 %1937
        %1939 = vrot.lane.b32.xlu0 %v1758, 96
        %v1940 = vpop.permute.xlu0 %1939
        %1941 = vrot.lane.b32.xlu0 %v1759, 96
        %v1942 = vpop.permute.xlu0 %1941
        %1943 = vrot.lane.b32.xlu0 %v1760, 96
        %v1944 = vpop.permute.xlu0 %1943
        %1945 = vrot.lane.b32.xlu0 %v1761, 96
        %v1946 = vpop.permute.xlu0 %1945
        %1955 = vrot.lane.b32.xlu0 %v1898, 32
        %v1956 = vpop.permute.xlu0 %1955
        %1957 = vrot.lane.b32.xlu0 %v1899, 32
        %v1958 = vpop.permute.xlu0 %1957
        %1959 = vrot.lane.b32.xlu0 %v1900, 32
        %v1960 = vpop.permute.xlu0 %1959
        %1961 = vrot.lane.b32.xlu0 %v1901, 32
        %v1962 = vpop.permute.xlu0 %1961
        %1963 = vrot.lane.b32.xlu0 %v1902, 32
        %v1964 = vpop.permute.xlu0 %1963
        %1965 = vrot.lane.b32.xlu0 %v1903, 32
        %v1966 = vpop.permute.xlu0 %1965
        %1967 = vrot.lane.b32.xlu0 %v1904, 32
        %v1968 = vpop.permute.xlu0 %1967
        %1969 = vrot.lane.b32.xlu0 %v1905, 32
        %v1970 = vpop.permute.xlu0 %1969
        %v1971 = vsel %vm615, %v1932, 0
        %v1973 = vsel %vm615, %v1934, 0
        %v1975 = vsel %vm615, %v1936, 0
        %v1977 = vsel %vm615, %v1938, 0
        %v1979 = vsel %vm615, %v1940, 0
        %v1981 = vsel %vm615, %v1942, 0
        %v1983 = vsel %vm615, %v1944, 0
        %v1985 = vsel %vm615, %v1946, 0
        %v1987 = vsel %vm615, %v1956, 0
        %v1989 = vsel %vm615, %v1958, 0
        %v1991 = vsel %vm615, %v1960, 0
        %v1993 = vsel %vm615, %v1962, 0
        %v1995 = vsel %vm615, %v1964, 0
        %v1997 = vsel %vm615, %v1966, 0
        %v1999 = vsel %vm615, %v1968, 0
        %v2001 = vsel %vm615, %v1970, 0
        %2003 = vmatprep.subr.mxu0 0.0
        %2004 = vmatpush1.xpose.msra.mxu0 %v1987
        %2005 = vmatprep.subr.mxu0 0.0
        %2006 = vmatpush1.xpose.msra.mxu0 %v1989
        %2007 = vmatprep.subr.mxu0 0.0
        %2008 = vmatpush1.xpose.msra.mxu0 %v1991
        %2009 = vmatprep.subr.mxu0 0.0
        %2010 = vmatpush1.xpose.msra.mxu0 %v1993
        %2011 = vmatprep.subr.mxu0 0.0
        %2012 = vmatpush1.xpose.msra.mxu0 %v1995
        %2013 = vmatprep.subr.mxu0 0.0
        %2014 = vmatpush1.xpose.msra.mxu0 %v1997
        %2015 = vmatprep.subr.mxu0 0.0
        %2016 = vmatpush1.xpose.msra.mxu0 %v1999
        %2017 = vmatprep.subr.mxu0 0.0
        %2018 = vmatpush1.xpose.msra.mxu0 %v2001
        %2019 = vmatprep.subr.mxu0 0.0
        %2020 = vmatpush1.xpose.msra.mxu0 0.0
        %2021 = vmatprep.subr.mxu0 0.0
        %2022 = vmatpush1.xpose.msra.mxu0 0.0
        %2023 = vmatprep.subr.mxu0 0.0
        %2024 = vmatpush1.xpose.msra.mxu0 0.0
        %2025 = vmatprep.subr.mxu0 0.0
        %2026 = vmatpush1.xpose.msra.mxu0 0.0
        %2027 = vmatprep.subr.mxu0 0.0
        %2028 = vmatpush1.xpose.msra.mxu0 0.0
        %2029 = vmatprep.subr.mxu0 0.0
        %2030 = vmatpush1.xpose.msra.mxu0 0.0
        %2031 = vmatprep.subr.mxu0 0.0
        %2032 = vmatpush1.xpose.msra.mxu0 0.0
        %2033 = vmatprep.subr.mxu0 0.0
        %2034 = vmatpush1.xpose.msra.mxu0 0.0
        %2035 = vmatprep.subr.mxu0 0.0
        %2036 = vmatpush1.xpose.msra.mxu0 0.0
        %2037 = vmatprep.subr.mxu0 0.0
        %2038 = vmatpush1.xpose.msra.mxu0 0.0
        %2039 = vmatprep.subr.mxu0 0.0
        %2040 = vmatpush1.xpose.msra.mxu0 0.0
        %2041 = vmatprep.subr.mxu0 0.0
        %2042 = vmatpush1.xpose.msra.mxu0 0.0
        %2043 = vmatprep.subr.mxu0 0.0
        %2044 = vmatpush1.xpose.msra.mxu0 0.0
        %2045 = vmatprep.subr.mxu0 0.0
        %2046 = vmatpush1.xpose.msra.mxu0 0.0
        %2047 = vmatprep.subr.mxu0 0.0
        %2048 = vmatpush1.xpose.msra.mxu0 0.0
        %2049 = vmatprep.subr.mxu0 0.0
        %2050 = vmatpush1.xpose.msra.mxu0 0.0
        %2051 = vmatprep.subr.mxu0 0.0
        %2052 = vmatpush1.xpose.msra.mxu0 0.0
        %2053 = vmatprep.subr.mxu0 0.0
        %2054 = vmatpush1.xpose.msra.mxu0 0.0
        %2055 = vmatprep.subr.mxu0 0.0
        %2056 = vmatpush1.xpose.msra.mxu0 0.0
        %2057 = vmatprep.subr.mxu0 0.0
        %2058 = vmatpush1.xpose.msra.mxu0 0.0
        %2059 = vmatprep.subr.mxu0 0.0
        %2060 = vmatpush1.xpose.msra.mxu0 0.0
        %2061 = vmatprep.subr.mxu0 0.0
        %2062 = vmatpush1.xpose.msra.mxu0 0.0
        %2063 = vmatprep.subr.mxu0 0.0
        %2064 = vmatpush1.xpose.msra.mxu0 0.0
        %2065 = vmatprep.subr.mxu0 0.0
        %2066 = vmatpush1.xpose.msra.mxu0 0.0
        %2067 = vmatprep.mubr.f32.mxu0 0.0
        %2068 = vmatmul.mubr.f32.gmra.mrb[0].mxu0 %v1971
        %v2069 = vpop.f32.mrb[0].mxu0
        %v2070 = vadd.f32 %v1915, %v2069
        %v2071 = vpop.f32.mrb[0].mxu0
        %2072 = vmatprep.mubr.f32.mxu0 0.0
        %2073 = vmatmul.mubr.f32.gmra.mrb[0].mxu0 %v1973
        %v2074 = vpop.f32.mrb[0].mxu0
        %v2075 = vadd.f32 %v1916, %v2074
        %v2076 = vpop.f32.mrb[0].mxu0
        %2077 = vmatprep.mubr.f32.mxu0 0.0
        %2078 = vmatmul.mubr.f32.gmra.mrb[0].mxu0 %v1975
        %v2079 = vpop.f32.mrb[0].mxu0
        %v2080 = vadd.f32 %v1917, %v2079
        %v2081 = vpop.f32.mrb[0].mxu0
        %2082 = vmatprep.mubr.f32.mxu0 0.0
        %2083 = vmatmul.mubr.f32.gmra.mrb[0].mxu0 %v1977
        %v2084 = vpop.f32.mrb[0].mxu0
        %v2085 = vadd.f32 %v1918, %v2084
        %v2086 = vpop.f32.mrb[0].mxu0
        %2087 = vmatprep.mubr.f32.mxu0 0.0
        %2088 = vmatmul.mubr.f32.gmra.mrb[0].mxu0 %v1979
        %v2089 = vpop.f32.mrb[0].mxu0
        %v2090 = vadd.f32 %v1919, %v2089
        %v2091 = vpop.f32.mrb[0].mxu0
        %2092 = vmatprep.mubr.f32.mxu0 0.0
        %2093 = vmatmul.mubr.f32.gmra.mrb[0].mxu0 %v1981
        %v2094 = vpop.f32.mrb[0].mxu0
        %v2095 = vadd.f32 %v1920, %v2094
        %v2096 = vpop.f32.mrb[0].mxu0
        %2097 = vmatprep.mubr.f32.mxu0 0.0
        %2098 = vmatmul.mubr.f32.gmra.mrb[0].mxu0 %v1983
        %v2099 = vpop.f32.mrb[0].mxu0
        %v2100 = vadd.f32 %v1921, %v2099
        %v2101 = vpop.f32.mrb[0].mxu0
        %2102 = vmatprep.mubr.f32.mxu0 0.0
        %2103 = vmatmul.mubr.f32.gmra.mrb[0].mxu0 %v1985
        %v2104 = vpop.f32.mrb[0].mxu0
        %v2105 = vadd.f32 %v1922, %v2104
        %v2106 = vpop.f32.mrb[0].mxu0
        %2107 = vdwg.mxu0
        %2116 = vrot.lane.b32.xlu0 %v1762, 96
        %v2117 = vpop.permute.xlu0 %2116
        %2118 = vrot.lane.b32.xlu0 %v1763, 96
        %v2119 = vpop.permute.xlu0 %2118
        %2120 = vrot.lane.b32.xlu0 %v1764, 96
        %v2121 = vpop.permute.xlu0 %2120
        %2122 = vrot.lane.b32.xlu0 %v1765, 96
        %v2123 = vpop.permute.xlu0 %2122
        %2124 = vrot.lane.b32.xlu0 %v1766, 96
        %v2125 = vpop.permute.xlu0 %2124
        %2126 = vrot.lane.b32.xlu0 %v1767, 96
        %v2127 = vpop.permute.xlu0 %2126
        %2128 = vrot.lane.b32.xlu0 %v1768, 96
        %v2129 = vpop.permute.xlu0 %2128
        %2130 = vrot.lane.b32.xlu0 %v1769, 96
        %v2131 = vpop.permute.xlu0 %2130
        %2140 = vrot.lane.b32.xlu0 %v1906, 32
        %v2141 = vpop.permute.xlu0 %2140
        %2142 = vrot.lane.b32.xlu0 %v1907, 32
        %v2143 = vpop.permute.xlu0 %2142
        %2144 = vrot.lane.b32.xlu0 %v1908, 32
        %v2145 = vpop.permute.xlu0 %2144
        %2146 = vrot.lane.b32.xlu0 %v1909, 32
        %v2147 = vpop.permute.xlu0 %2146
        %2148 = vrot.lane.b32.xlu0 %v1910, 32
        %v2149 = vpop.permute.xlu0 %2148
        %2150 = vrot.lane.b32.xlu0 %v1911, 32
        %v2151 = vpop.permute.xlu0 %2150
        %2152 = vrot.lane.b32.xlu0 %v1912, 32
        %v2153 = vpop.permute.xlu0 %2152
        %2154 = vrot.lane.b32.xlu0 %v1913, 32
        %v2155 = vpop.permute.xlu0 %2154
        %v2156 = vsel %vm615, %v2117, 0
        %v2158 = vsel %vm615, %v2119, 0
        %v2160 = vsel %vm615, %v2121, 0
        %v2162 = vsel %vm615, %v2123, 0
        %v2164 = vsel %vm615, %v2125, 0
        %v2166 = vsel %vm615, %v2127, 0
        %v2168 = vsel %vm615, %v2129, 0
        %v2170 = vsel %vm615, %v2131, 0
        %v2172 = vsel %vm615, %v2141, 0
        %v2174 = vsel %vm615, %v2143, 0
        %v2176 = vsel %vm615, %v2145, 0
        %v2178 = vsel %vm615, %v2147, 0
        %v2180 = vsel %vm615, %v2149, 0
        %v2182 = vsel %vm615, %v2151, 0
        %v2184 = vsel %vm615, %v2153, 0
        %v2186 = vsel %vm615, %v2155, 0
        %2188 = vmatprep.subr.mxu0 0.0
        %2189 = vmatpush1.xpose.msra.mxu0 %v2172
        %2190 = vmatprep.subr.mxu0 0.0
        %2191 = vmatpush1.xpose.msra.mxu0 %v2174
        %2192 = vmatprep.subr.mxu0 0.0
        %2193 = vmatpush1.xpose.msra.mxu0 %v2176
        %2194 = vmatprep.subr.mxu0 0.0
        %2195 = vmatpush1.xpose.msra.mxu0 %v2178
        %2196 = vmatprep.subr.mxu0 0.0
        %2197 = vmatpush1.xpose.msra.mxu0 %v2180
        %2198 = vmatprep.subr.mxu0 0.0
        %2199 = vmatpush1.xpose.msra.mxu0 %v2182
        %2200 = vmatprep.subr.mxu0 0.0
        %2201 = vmatpush1.xpose.msra.mxu0 %v2184
        %2202 = vmatprep.subr.mxu0 0.0
        %2203 = vmatpush1.xpose.msra.mxu0 %v2186
        %2204 = vmatprep.subr.mxu0 0.0
        %2205 = vmatpush1.xpose.msra.mxu0 0.0
        %2206 = vmatprep.subr.mxu0 0.0
        %2207 = vmatpush1.xpose.msra.mxu0 0.0
        %2208 = vmatprep.subr.mxu0 0.0
        %2209 = vmatpush1.xpose.msra.mxu0 0.0
        %2210 = vmatprep.subr.mxu0 0.0
        %2211 = vmatpush1.xpose.msra.mxu0 0.0
        %2212 = vmatprep.subr.mxu0 0.0
        %2213 = vmatpush1.xpose.msra.mxu0 0.0
        %2214 = vmatprep.subr.mxu0 0.0
        %2215 = vmatpush1.xpose.msra.mxu0 0.0
        %2216 = vmatprep.subr.mxu0 0.0
        %2217 = vmatpush1.xpose.msra.mxu0 0.0
        %2218 = vmatprep.subr.mxu0 0.0
        %2219 = vmatpush1.xpose.msra.mxu0 0.0
        %2220 = vmatprep.subr.mxu0 0.0
        %2221 = vmatpush1.xpose.msra.mxu0 0.0
        %2222 = vmatprep.subr.mxu0 0.0
        %2223 = vmatpush1.xpose.msra.mxu0 0.0
        %2224 = vmatprep.subr.mxu0 0.0
        %2225 = vmatpush1.xpose.msra.mxu0 0.0
        %2226 = vmatprep.subr.mxu0 0.0
        %2227 = vmatpush1.xpose.msra.mxu0 0.0
        %2228 = vmatprep.subr.mxu0 0.0
        %2229 = vmatpush1.xpose.msra.mxu0 0.0
        %2230 = vmatprep.subr.mxu0 0.0
        %2231 = vmatpush1.xpose.msra.mxu0 0.0
        %2232 = vmatprep.subr.mxu0 0.0
        %2233 = vmatpush1.xpose.msra.mxu0 0.0
        %2234 = vmatprep.subr.mxu0 0.0
        %2235 = vmatpush1.xpose.msra.mxu0 0.0
        %2236 = vmatprep.subr.mxu0 0.0
        %2237 = vmatpush1.xpose.msra.mxu0 0.0
        %2238 = vmatprep.subr.mxu0 0.0
        %2239 = vmatpush1.xpose.msra.mxu0 0.0
        %2240 = vmatprep.subr.mxu0 0.0
        %2241 = vmatpush1.xpose.msra.mxu0 0.0
        %2242 = vmatprep.subr.mxu0 0.0
        %2243 = vmatpush1.xpose.msra.mxu0 0.0
        %2244 = vmatprep.subr.mxu0 0.0
        %2245 = vmatpush1.xpose.msra.mxu0 0.0
        %2246 = vmatprep.subr.mxu0 0.0
        %2247 = vmatpush1.xpose.msra.mxu0 0.0
        %2248 = vmatprep.subr.mxu0 0.0
        %2249 = vmatpush1.xpose.msra.mxu0 0.0
        %2250 = vmatprep.subr.mxu0 0.0
        %2251 = vmatpush1.xpose.msra.mxu0 0.0
        %2252 = vmatprep.mubr.f32.mxu0 0.0
        %2253 = vmatmul.mubr.f32.gmra.mrb[0].mxu0 %v2156
        %v2254 = vpop.f32.mrb[0].mxu0
        %v2255 = vadd.f32 %v1915, %v2254
        %v2256 = vpop.f32.mrb[0].mxu0
        %2257 = vmatprep.mubr.f32.mxu0 0.0
        %2258 = vmatmul.mubr.f32.gmra.mrb[0].mxu0 %v2158
        %v2259 = vpop.f32.mrb[0].mxu0
        %v2260 = vadd.f32 %v1916, %v2259
        %v2261 = vpop.f32.mrb[0].mxu0
        %2262 = vmatprep.mubr.f32.mxu0 0.0
        %2263 = vmatmul.mubr.f32.gmra.mrb[0].mxu0 %v2160
        %v2264 = vpop.f32.mrb[0].mxu0
        %v2265 = vadd.f32 %v1917, %v2264
        %v2266 = vpop.f32.mrb[0].mxu0
        %2267 = vmatprep.mubr.f32.mxu0 0.0
        %2268 = vmatmul.mubr.f32.gmra.mrb[0].mxu0 %v2162
        %v2269 = vpop.f32.mrb[0].mxu0
        %v2270 = vadd.f32 %v1918, %v2269
        %v2271 = vpop.f32.mrb[0].mxu0
        %2272 = vmatprep.mubr.f32.mxu0 0.0
        %2273 = vmatmul.mubr.f32.gmra.mrb[0].mxu0 %v2164
        %v2274 = vpop.f32.mrb[0].mxu0
        %v2275 = vadd.f32 %v1919, %v2274
        %v2276 = vpop.f32.mrb[0].mxu0
        %2277 = vmatprep.mubr.f32.mxu0 0.0
        %2278 = vmatmul.mubr.f32.gmra.mrb[0].mxu0 %v2166
        %v2279 = vpop.f32.mrb[0].mxu0
        %v2280 = vadd.f32 %v1920, %v2279
        %v2281 = vpop.f32.mrb[0].mxu0
        %2282 = vmatprep.mubr.f32.mxu0 0.0
        %2283 = vmatmul.mubr.f32.gmra.mrb[0].mxu0 %v2168
        %v2284 = vpop.f32.mrb[0].mxu0
        %v2285 = vadd.f32 %v1921, %v2284
        %v2286 = vpop.f32.mrb[0].mxu0
        %2287 = vmatprep.mubr.f32.mxu0 0.0
        %2288 = vmatmul.mubr.f32.gmra.mrb[0].mxu0 %v2170
        %v2289 = vpop.f32.mrb[0].mxu0
        %v2290 = vadd.f32 %v1922, %v2289
        %v2291 = vpop.f32.mrb[0].mxu0
        %2292 = vdwg.mxu0
        %v2293 = vsel %vm461, %v2070, -inf
        %2294 = vmax.xlane.f32.xlu0 %v2293
        %v2295 = vpop.xlane.xlu0 %2294
        %v2296 = vsel %vm461, %v2075, -inf
        %2297 = vmax.xlane.f32.xlu0 %v2296
        %v2298 = vpop.xlane.xlu0 %2297
        %v2299 = vsel %vm461, %v2080, -inf
        %2300 = vmax.xlane.f32.xlu0 %v2299
        %v2301 = vpop.xlane.xlu0 %2300
        %v2302 = vsel %vm461, %v2085, -inf
        %2303 = vmax.xlane.f32.xlu0 %v2302
        %v2304 = vpop.xlane.xlu0 %2303
        %v2305 = vsel %vm461, %v2090, -inf
        %2306 = vmax.xlane.f32.xlu0 %v2305
        %v2307 = vpop.xlane.xlu0 %2306
        %v2308 = vsel %vm461, %v2095, -inf
        %2309 = vmax.xlane.f32.xlu0 %v2308
        %v2310 = vpop.xlane.xlu0 %2309
        %v2311 = vsel %vm461, %v2100, -inf
        %2312 = vmax.xlane.f32.xlu0 %v2311
        %v2313 = vpop.xlane.xlu0 %2312
        %v2314 = vsel %vm461, %v2105, -inf
        %2315 = vmax.xlane.f32.xlu0 %v2314
        %v2316 = vpop.xlane.xlu0 %2315
        %v2317 = vsel %vm461, %v2255, -inf
        %2318 = vmax.xlane.f32.xlu0 %v2317
        %v2319 = vpop.xlane.xlu0 %2318
        %v2320 = vsel %vm461, %v2260, -inf
        %2321 = vmax.xlane.f32.xlu0 %v2320
        %v2322 = vpop.xlane.xlu0 %2321
        %v2323 = vsel %vm461, %v2265, -inf
        %2324 = vmax.xlane.f32.xlu0 %v2323
        %v2325 = vpop.xlane.xlu0 %2324
        %v2326 = vsel %vm461, %v2270, -inf
        %2327 = vmax.xlane.f32.xlu0 %v2326
        %v2328 = vpop.xlane.xlu0 %2327
        %v2329 = vsel %vm461, %v2275, -inf
        %2330 = vmax.xlane.f32.xlu0 %v2329
        %v2331 = vpop.xlane.xlu0 %2330
        %v2332 = vsel %vm461, %v2280, -inf
        %2333 = vmax.xlane.f32.xlu0 %v2332
        %v2334 = vpop.xlane.xlu0 %2333
        %v2335 = vsel %vm461, %v2285, -inf
        %2336 = vmax.xlane.f32.xlu0 %v2335
        %v2337 = vpop.xlane.xlu0 %2336
        %v2338 = vsel %vm461, %v2290, -inf
        %2339 = vmax.xlane.f32.xlu0 %v2338
        %v2340 = vpop.xlane.xlu0 %2339
        %v2341 = vsub.f32 %v2070, %v2295
        %v2342 = vsub.f32 %v2075, %v2298
        %v2343 = vsub.f32 %v2080, %v2301
        %v2344 = vsub.f32 %v2085, %v2304
        %v2345 = vsub.f32 %v2090, %v2307
        %v2346 = vsub.f32 %v2095, %v2310
        %v2347 = vsub.f32 %v2100, %v2313
        %v2348 = vsub.f32 %v2105, %v2316
        %v2349 = vsub.f32 %v2255, %v2319
        %v2350 = vsub.f32 %v2260, %v2322
        %v2351 = vsub.f32 %v2265, %v2325
        %v2352 = vsub.f32 %v2270, %v2328
        %v2353 = vsub.f32 %v2275, %v2331
        %v2354 = vsub.f32 %v2280, %v2334
        %v2355 = vsub.f32 %v2285, %v2337
        %v2356 = vsub.f32 %v2290, %v2340
        %v2357 = vmul.f32 %v2341, 1.442695
        %v2358 = vpow.pop %v2357
        %v2359 = vmul.f32 %v2342, 1.442695
        %v2360 = vpow.pop %v2359
        %v2361 = vmul.f32 %v2343, 1.442695
        %v2362 = vpow.pop %v2361
        %v2363 = vmul.f32 %v2344, 1.442695
        %v2364 = vpow.pop %v2363
        %v2365 = vmul.f32 %v2345, 1.442695
        %v2366 = vpow.pop %v2365
        %v2367 = vmul.f32 %v2346, 1.442695
        %v2368 = vpow.pop %v2367
        %v2369 = vmul.f32 %v2347, 1.442695
        %v2370 = vpow.pop %v2369
        %v2371 = vmul.f32 %v2348, 1.442695
        %v2372 = vpow.pop %v2371
        %v2373 = vmul.f32 %v2349, 1.442695
        %v2374 = vpow.pop %v2373
        %v2375 = vmul.f32 %v2350, 1.442695
        %v2376 = vpow.pop %v2375
        %v2377 = vmul.f32 %v2351, 1.442695
        %v2378 = vpow.pop %v2377
        %v2379 = vmul.f32 %v2352, 1.442695
        %v2380 = vpow.pop %v2379
        %v2381 = vmul.f32 %v2353, 1.442695
        %v2382 = vpow.pop %v2381
        %v2383 = vmul.f32 %v2354, 1.442695
        %v2384 = vpow.pop %v2383
        %v2385 = vmul.f32 %v2355, 1.442695
        %v2386 = vpow.pop %v2385
        %v2387 = vmul.f32 %v2356, 1.442695
        %v2388 = vpow.pop %v2387
        %v2389 = vsel %vm461, %v2358, 0.0
        %2390 = vadd.xlane.f32.xlu0 %v2389
        %v2391 = vpop.xlane.xlu0 %2390
        %v2392 = vsel %vm461, %v2360, 0.0
        %2393 = vadd.xlane.f32.xlu0 %v2392
        %v2394 = vpop.xlane.xlu0 %2393
        %v2395 = vsel %vm461, %v2362, 0.0
        %2396 = vadd.xlane.f32.xlu0 %v2395
        %v2397 = vpop.xlane.xlu0 %2396
        %v2398 = vsel %vm461, %v2364, 0.0
        %2399 = vadd.xlane.f32.xlu0 %v2398
        %v2400 = vpop.xlane.xlu0 %2399
        %v2401 = vsel %vm461, %v2366, 0.0
        %2402 = vadd.xlane.f32.xlu0 %v2401
        %v2403 = vpop.xlane.xlu0 %2402
        %v2404 = vsel %vm461, %v2368, 0.0
        %2405 = vadd.xlane.f32.xlu0 %v2404
        %v2406 = vpop.xlane.xlu0 %2405
        %v2407 = vsel %vm461, %v2370, 0.0
        %2408 = vadd.xlane.f32.xlu0 %v2407
        %v2409 = vpop.xlane.xlu0 %2408
        %v2410 = vsel %vm461, %v2372, 0.0
        %2411 = vadd.xlane.f32.xlu0 %v2410
        %v2412 = vpop.xlane.xlu0 %2411
        %v2413 = vsel %vm461, %v2374, 0.0
        %2414 = vadd.xlane.f32.xlu0 %v2413
        %v2415 = vpop.xlane.xlu0 %2414
        %v2416 = vsel %vm461, %v2376, 0.0
        %2417 = vadd.xlane.f32.xlu0 %v2416
        %v2418 = vpop.xlane.xlu0 %2417
        %v2419 = vsel %vm461, %v2378, 0.0
        %2420 = vadd.xlane.f32.xlu0 %v2419
        %v2421 = vpop.xlane.xlu0 %2420
        %v2422 = vsel %vm461, %v2380, 0.0
        %2423 = vadd.xlane.f32.xlu0 %v2422
        %v2424 = vpop.xlane.xlu0 %2423
        %v2425 = vsel %vm461, %v2382, 0.0
        %2426 = vadd.xlane.f32.xlu0 %v2425
        %v2427 = vpop.xlane.xlu0 %2426
        %v2428 = vsel %vm461, %v2384, 0.0
        %2429 = vadd.xlane.f32.xlu0 %v2428
        %v2430 = vpop.xlane.xlu0 %2429
        %v2431 = vsel %vm461, %v2386, 0.0
        %2432 = vadd.xlane.f32.xlu0 %v2431
        %v2433 = vpop.xlane.xlu0 %2432
        %v2434 = vsel %vm461, %v2388, 0.0
        %2435 = vadd.xlane.f32.xlu0 %v2434
        %v2436 = vpop.xlane.xlu0 %2435
        %v2437 = vrcp.pop %v2391
        %v2438 = vrcp.pop %v2394
        %v2439 = vrcp.pop %v2397
        %v2440 = vrcp.pop %v2400
        %v2441 = vrcp.pop %v2403
        %v2442 = vrcp.pop %v2406
        %v2443 = vrcp.pop %v2409
        %v2444 = vrcp.pop %v2412
        %v2445 = vrcp.pop %v2415
        %v2446 = vrcp.pop %v2418
        %v2447 = vrcp.pop %v2421
        %v2448 = vrcp.pop %v2424
        %v2449 = vrcp.pop %v2427
        %v2450 = vrcp.pop %v2430
        %v2451 = vrcp.pop %v2433
        %v2452 = vrcp.pop %v2436
        %v2453 = vmul.f32 %v2358, %v2437
        %v2454 = vmul.f32 %v2360, %v2438
        %v2455 = vmul.f32 %v2362, %v2439
        %v2456 = vmul.f32 %v2364, %v2440
        %v2457 = vmul.f32 %v2366, %v2441
        %v2458 = vmul.f32 %v2368, %v2442
        %v2459 = vmul.f32 %v2370, %v2443
        %v2460 = vmul.f32 %v2372, %v2444
        %v2461 = vmul.f32 %v2374, %v2445
        %v2462 = vmul.f32 %v2376, %v2446
        %v2463 = vmul.f32 %v2378, %v2447
        %v2464 = vmul.f32 %v2380, %v2448
        %v2465 = vmul.f32 %v2382, %v2449
        %v2466 = vmul.f32 %v2384, %v2450
        %v2467 = vmul.f32 %v2386, %v2451
        %v2468 = vmul.f32 %v2388, %v2452
        %v2469 = vpack.c.bf16 %v2454, %v2453
        %v2470 = vpack.c.bf16 %v2456, %v2455
        %v2471 = vpack.c.bf16 %v2458, %v2457
        %v2472 = vpack.c.bf16 %v2460, %v2459
        %v2473 = vpack.c.bf16 %v2462, %v2461
        %v2474 = vpack.c.bf16 %v2464, %v2463
        %v2475 = vpack.c.bf16 %v2466, %v2465
        %v2476 = vpack.c.bf16 %v2468, %v2467
        %2481 = vrot.lane.b32.xlu0 %v1425, 96
        %v2482 = vpop.permute.xlu0 %2481
        %2483 = vrot.lane.b32.xlu0 %v1426, 96
        %v2484 = vpop.permute.xlu0 %2483
        %2485 = vrot.lane.b32.xlu0 %v1427, 96
        %v2486 = vpop.permute.xlu0 %2485
        %2487 = vrot.lane.b32.xlu0 %v1428, 96
        %v2488 = vpop.permute.xlu0 %2487
        %v2494 = vsel %vm461, %v2469, 0
        %v2497 = vsel %vm461, %v2470, 0
        %v2500 = vsel %vm461, %v2471, 0
        %v2503 = vsel %vm461, %v2472, 0
        %2505 = vmatprep.subr.bf16.mxu0 0
        %2506 = vmatpush1.bf16.msra.mxu0 %v2482
        %2507 = vmatprep.subr.bf16.mxu0 0
        %2508 = vmatpush1.bf16.msra.mxu0 %v2484
        %2509 = vmatprep.subr.bf16.mxu0 0
        %2510 = vmatpush1.bf16.msra.mxu0 %v2486
        %2511 = vmatprep.subr.bf16.mxu0 0
        %2512 = vmatpush1.bf16.msra.mxu0 %v2488
        %2513 = vmatprep.subr.bf16.mxu0 0
        %2514 = vmatpush1.bf16.msra.mxu0 0
        %2515 = vmatprep.subr.bf16.mxu0 0
        %2516 = vmatpush1.bf16.msra.mxu0 0
        %2517 = vmatprep.subr.bf16.mxu0 0
        %2518 = vmatpush1.bf16.msra.mxu0 0
        %2519 = vmatprep.subr.bf16.mxu0 0
        %2520 = vmatpush1.bf16.msra.mxu0 0
        %2521 = vmatprep.subr.bf16.mxu0 0
        %2522 = vmatpush1.bf16.msra.mxu0 0
        %2523 = vmatprep.subr.bf16.mxu0 0
        %2524 = vmatpush1.bf16.msra.mxu0 0
        %2525 = vmatprep.subr.bf16.mxu0 0
        %2526 = vmatpush1.bf16.msra.mxu0 0
        %2527 = vmatprep.subr.bf16.mxu0 0
        %2528 = vmatpush1.bf16.msra.mxu0 0
        %2529 = vmatprep.subr.bf16.mxu0 0
        %2530 = vmatpush1.bf16.msra.mxu0 0
        %2531 = vmatprep.subr.bf16.mxu0 0
        %2532 = vmatpush1.bf16.msra.mxu0 0
        %2533 = vmatprep.subr.bf16.mxu0 0
        %2534 = vmatpush1.bf16.msra.mxu0 0
        %2535 = vmatprep.subr.bf16.mxu0 0
        %2536 = vmatpush1.bf16.msra.mxu0 0
        %2537 = vmatprep.mubr.bf16.mxu0 0
        %2538 = vmatmul.mubr.bf16.gmra.mrb[0].mxu0 %v2494
        %v2539 = vpop.f32.mrb[0].mxu0
        %v2540 = vadd.f32 0.0, %v2539
        %v2541 = vpop.f32.mrb[0].mxu0
        %v2542 = vpop.f32.mrb[0].mxu0
        %v2543 = vadd.f32 0.0, %v2542
        %v2544 = vpop.f32.mrb[0].mxu0
        %2545 = vmatprep.mubr.bf16.mxu0 0
        %2546 = vmatmul.mubr.bf16.gmra.mrb[0].mxu0 %v2497
        %v2547 = vpop.f32.mrb[0].mxu0
        %v2548 = vadd.f32 0.0, %v2547
        %v2549 = vpop.f32.mrb[0].mxu0
        %v2550 = vpop.f32.mrb[0].mxu0
        %v2551 = vadd.f32 0.0, %v2550
        %v2552 = vpop.f32.mrb[0].mxu0
        %2553 = vmatprep.mubr.bf16.mxu0 0
        %2554 = vmatmul.mubr.bf16.gmra.mrb[0].mxu0 %v2500
        %v2555 = vpop.f32.mrb[0].mxu0
        %v2556 = vadd.f32 0.0, %v2555
        %v2557 = vpop.f32.mrb[0].mxu0
        %v2558 = vpop.f32.mrb[0].mxu0
        %v2559 = vadd.f32 0.0, %v2558
        %v2560 = vpop.f32.mrb[0].mxu0
        %2561 = vmatprep.mubr.bf16.mxu0 0
        %2562 = vmatmul.mubr.bf16.gmra.mrb[0].mxu0 %v2503
        %v2563 = vpop.f32.mrb[0].mxu0
        %v2564 = vadd.f32 0.0, %v2563
        %v2565 = vpop.f32.mrb[0].mxu0
        %v2566 = vpop.f32.mrb[0].mxu0
        %v2567 = vadd.f32 0.0, %v2566
        %v2568 = vpop.f32.mrb[0].mxu0
        %2569 = vdwg.mxu0
        %2574 = vrot.lane.b32.xlu0 %v1429, 96
        %v2575 = vpop.permute.xlu0 %2574
        %2576 = vrot.lane.b32.xlu0 %v1430, 96
        %v2577 = vpop.permute.xlu0 %2576
        %2578 = vrot.lane.b32.xlu0 %v1431, 96
        %v2579 = vpop.permute.xlu0 %2578
        %2580 = vrot.lane.b32.xlu0 %v1432, 96
        %v2581 = vpop.permute.xlu0 %2580
        %v2587 = vsel %vm461, %v2473, 0
        %v2590 = vsel %vm461, %v2474, 0
        %v2593 = vsel %vm461, %v2475, 0
        %v2596 = vsel %vm461, %v2476, 0
        %2598 = vmatprep.subr.bf16.mxu0 0
        %2599 = vmatpush1.bf16.msra.mxu0 %v2575
        %2600 = vmatprep.subr.bf16.mxu0 0
        %2601 = vmatpush1.bf16.msra.mxu0 %v2577
        %2602 = vmatprep.subr.bf16.mxu0 0
        %2603 = vmatpush1.bf16.msra.mxu0 %v2579
        %2604 = vmatprep.subr.bf16.mxu0 0
        %2605 = vmatpush1.bf16.msra.mxu0 %v2581
        %2606 = vmatprep.subr.bf16.mxu0 0
        %2607 = vmatpush1.bf16.msra.mxu0 0
        %2608 = vmatprep.subr.bf16.mxu0 0
        %2609 = vmatpush1.bf16.msra.mxu0 0
        %2610 = vmatprep.subr.bf16.mxu0 0
        %2611 = vmatpush1.bf16.msra.mxu0 0
        %2612 = vmatprep.subr.bf16.mxu0 0
        %2613 = vmatpush1.bf16.msra.mxu0 0
        %2614 = vmatprep.subr.bf16.mxu0 0
        %2615 = vmatpush1.bf16.msra.mxu0 0
        %2616 = vmatprep.subr.bf16.mxu0 0
        %2617 = vmatpush1.bf16.msra.mxu0 0
        %2618 = vmatprep.subr.bf16.mxu0 0
        %2619 = vmatpush1.bf16.msra.mxu0 0
        %2620 = vmatprep.subr.bf16.mxu0 0
        %2621 = vmatpush1.bf16.msra.mxu0 0
        %2622 = vmatprep.subr.bf16.mxu0 0
        %2623 = vmatpush1.bf16.msra.mxu0 0
        %2624 = vmatprep.subr.bf16.mxu0 0
        %2625 = vmatpush1.bf16.msra.mxu0 0
        %2626 = vmatprep.subr.bf16.mxu0 0
        %2627 = vmatpush1.bf16.msra.mxu0 0
        %2628 = vmatprep.subr.bf16.mxu0 0
        %2629 = vmatpush1.bf16.msra.mxu0 0
        %2630 = vmatprep.mubr.bf16.mxu0 0
        %2631 = vmatmul.mubr.bf16.gmra.mrb[0].mxu0 %v2587
        %v2632 = vpop.f32.mrb[0].mxu0
        %v2633 = vadd.f32 0.0, %v2632
        %v2634 = vpop.f32.mrb[0].mxu0
        %v2635 = vpop.f32.mrb[0].mxu0
        %v2636 = vadd.f32 0.0, %v2635
        %v2637 = vpop.f32.mrb[0].mxu0
        %2638 = vmatprep.mubr.bf16.mxu0 0
        %2639 = vmatmul.mubr.bf16.gmra.mrb[0].mxu0 %v2590
        %v2640 = vpop.f32.mrb[0].mxu0
        %v2641 = vadd.f32 0.0, %v2640
        %v2642 = vpop.f32.mrb[0].mxu0
        %v2643 = vpop.f32.mrb[0].mxu0
        %v2644 = vadd.f32 0.0, %v2643
        %v2645 = vpop.f32.mrb[0].mxu0
        %2646 = vmatprep.mubr.bf16.mxu0 0
        %2647 = vmatmul.mubr.bf16.gmra.mrb[0].mxu0 %v2593
        %v2648 = vpop.f32.mrb[0].mxu0
        %v2649 = vadd.f32 0.0, %v2648
        %v2650 = vpop.f32.mrb[0].mxu0
        %v2651 = vpop.f32.mrb[0].mxu0
        %v2652 = vadd.f32 0.0, %v2651
        %v2653 = vpop.f32.mrb[0].mxu0
        %2654 = vmatprep.mubr.bf16.mxu0 0
        %2655 = vmatmul.mubr.bf16.gmra.mrb[0].mxu0 %v2596
        %v2656 = vpop.f32.mrb[0].mxu0
        %v2657 = vadd.f32 0.0, %v2656
        %v2658 = vpop.f32.mrb[0].mxu0
        %v2659 = vpop.f32.mrb[0].mxu0
        %v2660 = vadd.f32 0.0, %v2659
        %v2661 = vpop.f32.mrb[0].mxu0
        %2662 = vdwg.mxu0
        %v2663 = vpack.c.bf16 %v2543, %v2540
        %v2664 = vpack.c.bf16 %v2551, %v2548
        %v2665 = vpack.c.bf16 %v2559, %v2556
        %v2666 = vpack.c.bf16 %v2567, %v2564
        %v2667 = vpack.c.bf16 %v2636, %v2633
        %v2668 = vpack.c.bf16 %v2644, %v2641
        %v2669 = vpack.c.bf16 %v2652, %v2649
        %v2670 = vpack.c.bf16 %v2660, %v2657
        %2679 = vrot.lane.b32.xlu0 %v2663, 32
        %v2680 = vpop.permute.xlu0 %2679
        %2681 = vrot.lane.b32.xlu0 %v2664, 32
        %v2682 = vpop.permute.xlu0 %2681
        %2683 = vrot.lane.b32.xlu0 %v2665, 32
        %v2684 = vpop.permute.xlu0 %2683
        %2685 = vrot.lane.b32.xlu0 %v2666, 32
        %v2686 = vpop.permute.xlu0 %2685
        %2687 = vrot.lane.b32.xlu0 %v2667, 32
        %v2688 = vpop.permute.xlu0 %2687
        %2689 = vrot.lane.b32.xlu0 %v2668, 32
        %v2690 = vpop.permute.xlu0 %2689
        %2691 = vrot.lane.b32.xlu0 %v2669, 32
        %v2692 = vpop.permute.xlu0 %2691
        %2693 = vrot.lane.b32.xlu0 %v2670, 32
        %v2694 = vpop.permute.xlu0 %2693
        %vm2703 = vcmask 523520
        %2704 = vst.msk [vmem:[#allocation2] sm:$0xff] %vm2703, %v2680
        %2705 = vst.msk [vmem:[#allocation2 + $0x8] sm:$0xff] %vm2703, %v2682
        %2706 = vst.msk [vmem:[#allocation2 + $0x10] sm:$0xff] %vm2703, %v2684
        %2707 = vst.msk [vmem:[#allocation2 + $0x18] sm:$0xff] %vm2703, %v2686
        %2708 = vst.msk [vmem:[#allocation2 + $0x20] sm:$0xff] %vm2703, %v2688
        %2709 = vst.msk [vmem:[#allocation2 + $0x28] sm:$0xff] %vm2703, %v2690
        %2710 = vst.msk [vmem:[#allocation2 + $0x30] sm:$0xff] %vm2703, %v2692
        %2711 = vst.msk [vmem:[#allocation2 + $0x38] sm:$0xff] %vm2703, %v2694
        %v2712 = vld [vmem:[#allocation2] sm:$0xff]
        %v2713 = vld [vmem:[#allocation2 + $0x8] sm:$0xff]
        %v2714 = vld [vmem:[#allocation2 + $0x10] sm:$0xff]
        %v2715 = vld [vmem:[#allocation2 + $0x18] sm:$0xff]
        %v2716 = vld [vmem:[#allocation2 + $0x20] sm:$0xff]
        %v2717 = vld [vmem:[#allocation2 + $0x28] sm:$0xff]
        %v2718 = vld [vmem:[#allocation2 + $0x30] sm:$0xff]
        %v2719 = vld [vmem:[#allocation2 + $0x38] sm:$0xff]
        %v2720 = vld [vmem:[#allocation9] sm:$0xf]
        %v2721 = vld [vmem:[#allocation9 + $0x4] sm:$0xf]
        %v2722 = vld [vmem:[#allocation9 + $0x8] sm:$0xf]
        %v2723 = vld [vmem:[#allocation9 + $0xc] sm:$0xf]
        %v2724 = vld [vmem:[#allocation9 + $0x10] sm:$0xf]
        %v2725 = vld [vmem:[#allocation9 + $0x14] sm:$0xf]
        %v2726 = vld [vmem:[#allocation9 + $0x18] sm:$0xf]
        %v2727 = vld [vmem:[#allocation9 + $0x1c] sm:$0xf]
        %v2728 = vld [vmem:[%s6] sm:$0x1]
        %v2730 = vlaneseq
        %v2731 = vshrl.u32 %v2730, 7
        %v2732 = vsub.s32 0, %v2731
        %v2733 = vrot.slane %v2728, %v2732
        %v2743 = vunpack.c.l.b16 %v2720
        %v2744 = vunpack.c.l.b16 %v2721
        %v2745 = vunpack.c.l.b16 %v2722
        %v2746 = vunpack.c.l.b16 %v2723
        %v2747 = vunpack.c.l.b16 %v2724
        %v2748 = vunpack.c.l.b16 %v2725
        %v2749 = vunpack.c.l.b16 %v2726
        %v2750 = vunpack.c.l.b16 %v2727
        %v2751 = vpack.c.b16 %v2744, %v2743
        %v2752 = vpack.c.b16 %v2746, %v2745
        %v2753 = vpack.c.b16 %v2748, %v2747
        %v2754 = vpack.c.b16 %v2750, %v2749
        %v2760 = vsel %vm461, %v2712, 0
        %v2763 = vsel %vm461, %v2713, 0
        %v2766 = vsel %vm461, %v2714, 0
        %v2769 = vsel %vm461, %v2715, 0
        %v2772 = vsel %vm461, %v2716, 0
        %v2775 = vsel %vm461, %v2717, 0
        %v2778 = vsel %vm461, %v2718, 0
        %v2781 = vsel %vm461, %v2719, 0
        %2783 = vmatprep.subr.bf16.mxu0 0
        %2784 = vmatpush1.bf16.msra.mxu0 %v2751
        %2785 = vmatprep.subr.bf16.mxu0 0
        %2786 = vmatpush1.bf16.msra.mxu0 %v2752
        %2787 = vmatprep.subr.bf16.mxu0 0
        %2788 = vmatpush1.bf16.msra.mxu0 %v2753
        %2789 = vmatprep.subr.bf16.mxu0 0
        %2790 = vmatpush1.bf16.msra.mxu0 %v2754
        %2791 = vmatprep.subr.bf16.mxu0 0
        %2792 = vmatpush1.bf16.msra.mxu0 0
        %2793 = vmatprep.subr.bf16.mxu0 0
        %2794 = vmatpush1.bf16.msra.mxu0 0
        %2795 = vmatprep.subr.bf16.mxu0 0
        %2796 = vmatpush1.bf16.msra.mxu0 0
        %2797 = vmatprep.subr.bf16.mxu0 0
        %2798 = vmatpush1.bf16.msra.mxu0 0
        %2799 = vmatprep.subr.bf16.mxu0 0
        %2800 = vmatpush1.bf16.msra.mxu0 0
        %2801 = vmatprep.subr.bf16.mxu0 0
        %2802 = vmatpush1.bf16.msra.mxu0 0
        %2803 = vmatprep.subr.bf16.mxu0 0
        %2804 = vmatpush1.bf16.msra.mxu0 0
        %2805 = vmatprep.subr.bf16.mxu0 0
        %2806 = vmatpush1.bf16.msra.mxu0 0
        %2807 = vmatprep.subr.bf16.mxu0 0
        %2808 = vmatpush1.bf16.msra.mxu0 0
        %2809 = vmatprep.subr.bf16.mxu0 0
        %2810 = vmatpush1.bf16.msra.mxu0 0
        %2811 = vmatprep.subr.bf16.mxu0 0
        %2812 = vmatpush1.bf16.msra.mxu0 0
        %2813 = vmatprep.subr.bf16.mxu0 0
        %2814 = vmatpush1.bf16.msra.mxu0 0
        %2815 = vmatprep.mubr.bf16.mxu0 0
        %2816 = vmatmul.mubr.bf16.gmra.mrb[0].mxu0 %v2760
        %v2817 = vpop.f32.mrb[0].mxu0
        %v2818 = vadd.f32 %v2733, %v2817
        %v2819 = vpop.f32.mrb[0].mxu0
        %v2820 = vpop.f32.mrb[0].mxu0
        %v2821 = vadd.f32 %v2733, %v2820
        %v2822 = vpop.f32.mrb[0].mxu0
        %2823 = vmatprep.mubr.bf16.mxu0 0
        %2824 = vmatmul.mubr.bf16.gmra.mrb[0].mxu0 %v2763
        %v2825 = vpop.f32.mrb[0].mxu0
        %v2826 = vadd.f32 %v2733, %v2825
        %v2827 = vpop.f32.mrb[0].mxu0
        %v2828 = vpop.f32.mrb[0].mxu0
        %v2829 = vadd.f32 %v2733, %v2828
        %v2830 = vpop.f32.mrb[0].mxu0
        %2831 = vmatprep.mubr.bf16.mxu0 0
        %2832 = vmatmul.mubr.bf16.gmra.mrb[0].mxu0 %v2766
        %v2833 = vpop.f32.mrb[0].mxu0
        %v2834 = vadd.f32 %v2733, %v2833
        %v2835 = vpop.f32.mrb[0].mxu0
        %v2836 = vpop.f32.mrb[0].mxu0
        %v2837 = vadd.f32 %v2733, %v2836
        %v2838 = vpop.f32.mrb[0].mxu0
        %2839 = vmatprep.mubr.bf16.mxu0 0
        %2840 = vmatmul.mubr.bf16.gmra.mrb[0].mxu0 %v2769
        %v2841 = vpop.f32.mrb[0].mxu0
        %v2842 = vadd.f32 %v2733, %v2841
        %v2843 = vpop.f32.mrb[0].mxu0
        %v2844 = vpop.f32.mrb[0].mxu0
        %v2845 = vadd.f32 %v2733, %v2844
        %v2846 = vpop.f32.mrb[0].mxu0
        %2847 = vmatprep.mubr.bf16.mxu0 0
        %2848 = vmatmul.mubr.bf16.gmra.mrb[0].mxu0 %v2772
        %v2849 = vpop.f32.mrb[0].mxu0
        %v2850 = vadd.f32 %v2733, %v2849
        %v2851 = vpop.f32.mrb[0].mxu0
        %v2852 = vpop.f32.mrb[0].mxu0
        %v2853 = vadd.f32 %v2733, %v2852
        %v2854 = vpop.f32.mrb[0].mxu0
        %2855 = vmatprep.mubr.bf16.mxu0 0
        %2856 = vmatmul.mubr.bf16.gmra.mrb[0].mxu0 %v2775
        %v2857 = vpop.f32.mrb[0].mxu0
        %v2858 = vadd.f32 %v2733, %v2857
        %v2859 = vpop.f32.mrb[0].mxu0
        %v2860 = vpop.f32.mrb[0].mxu0
        %v2861 = vadd.f32 %v2733, %v2860
        %v2862 = vpop.f32.mrb[0].mxu0
        %2863 = vmatprep.mubr.bf16.mxu0 0
        %2864 = vmatmul.mubr.bf16.gmra.mrb[0].mxu0 %v2778
        %v2865 = vpop.f32.mrb[0].mxu0
        %v2866 = vadd.f32 %v2733, %v2865
        %v2867 = vpop.f32.mrb[0].mxu0
        %v2868 = vpop.f32.mrb[0].mxu0
        %v2869 = vadd.f32 %v2733, %v2868
        %v2870 = vpop.f32.mrb[0].mxu0
        %2871 = vmatprep.mubr.bf16.mxu0 0
        %2872 = vmatmul.mubr.bf16.gmra.mrb[0].mxu0 %v2781
        %v2873 = vpop.f32.mrb[0].mxu0
        %v2874 = vadd.f32 %v2733, %v2873
        %v2875 = vpop.f32.mrb[0].mxu0
        %v2876 = vpop.f32.mrb[0].mxu0
        %v2877 = vadd.f32 %v2733, %v2876
        %v2878 = vpop.f32.mrb[0].mxu0
        %2879 = vdwg.mxu0
        %2880 = vst.msk [vmem:[%s341] sm:$0xff] %vm461, %v2818
        %2881 = vst.msk [vmem:[%s341 + $0x8] sm:$0xff] %vm461, %v2821
        %2882 = vst.msk [vmem:[%s341 + $0x10] sm:$0xff] %vm461, %v2826
        %2883 = vst.msk [vmem:[%s341 + $0x18] sm:$0xff] %vm461, %v2829
        %2884 = vst.msk [vmem:[%s341 + $0x20] sm:$0xff] %vm461, %v2834
        %2885 = vst.msk [vmem:[%s341 + $0x28] sm:$0xff] %vm461, %v2837
        %2886 = vst.msk [vmem:[%s341 + $0x30] sm:$0xff] %vm461, %v2842
        %2887 = vst.msk [vmem:[%s341 + $0x38] sm:$0xff] %vm461, %v2845
        %2888 = vst.msk [vmem:[%s341 + $0x40] sm:$0xff] %vm461, %v2850
        %2889 = vst.msk [vmem:[%s341 + $0x48] sm:$0xff] %vm461, %v2853
        %2890 = vst.msk [vmem:[%s341 + $0x50] sm:$0xff] %vm461, %v2858
        %2891 = vst.msk [vmem:[%s341 + $0x58] sm:$0xff] %vm461, %v2861
        %2892 = vst.msk [vmem:[%s341 + $0x60] sm:$0xff] %vm461, %v2866
        %2893 = vst.msk [vmem:[%s341 + $0x68] sm:$0xff] %vm461, %v2869
        %2894 = vst.msk [vmem:[%s341 + $0x70] sm:$0xff] %vm461, %v2874
        %2895 = vst.msk [vmem:[%s341 + $0x78] sm:$0xff] %vm461, %v2877
        %s2896 = sand.u32 %s186, 1
        %s2897 = scalar_lea.sflag [#allocation5], %s2896
        %s2898 = sand.u32 %s186, 1
        %s2899 = smul.addr %s2898, 128
        %s2900 = scalar_lea.vmem [#allocation11], %s2899
        // Predicated region
        $region65: #{tpu_custom_call.1} parent=47 // pred_check
          %p2901 = pneg %p196
        $region66: #{tpu_custom_call.1} parent=47 // pred_check_branch
          %2903 = sbr.rel (%p2901) target = $region68
        $region67: #{tpu_custom_call.1} parent=47 // pred_region
          %s2904 = smul.u32 2, %s26
          %s2906 = ssub.s32 2048, 2048
          %2907 = vsyncadd %s2897, %s2906
          %s2908 = smul.addr %s2904, 8
          %s2909 = smul.addr %s2908, 128
          %s2910 = scalar_lea.hbm %s7, %s2909
          %s2911 = sshll.u32 %s2900, 4
          %s2912 = int_to_ptr.vmem [resolvable:$true] %s2911
          %2917 = dma.vmem_to_hbm [thread:$0]  %s2912, 2048, %s2910, %s2897, 128, 128, 8
        $region68: #{tpu_custom_call.1} parent=47 // pred_fallthru
          _
      $region48: #{tpu_custom_call.1} parent=5 // pred_fallthru
        _
      %p2918 = scmp.le.s32.totalorder 2, %s21
      // Predicated region
      $region69: #{tpu_custom_call.1} parent=5 // pred_check
        %p2919 = pneg %p2918
      $region70: #{tpu_custom_call.1} parent=5 // pred_check_branch
        %2921 = sbr.rel (%p2919) target = $region72
      $region71: #{tpu_custom_call.1} parent=5 // pred_region
        %s2922 = ssub.s32 %s21, 2
        // Predicated region
        $region73: #{tpu_custom_call.1} parent=71 // pred_check
          %p2923 = pneg %p202
        $region74: #{tpu_custom_call.1} parent=71 // pred_check_branch
          %2925 = sbr.rel (%p2923) target = $region76
        $region75: #{tpu_custom_call.1} parent=71 // pred_region
          %s2926 = sand.u32 %s187, 1
          %s2927 = scalar_lea.sflag [#allocation5], %s2926
          %s2928 = sand.u32 %s187, 1
          %s2929 = smul.addr %s2928, 128
          %s2930 = scalar_lea.vmem [#allocation11], %s2929
          %2931 = dma.done %s2927, 2048
        $region76: #{tpu_custom_call.1} parent=71 // pred_fallthru
          _
      $region72: #{tpu_custom_call.1} parent=5 // pred_fallthru
        _
    $region6: #{tpu_custom_call.1} parent=1 // loop_footer
      %s25 = sadd.s32 1, %s21
    $region7: #{tpu_custom_call.1} parent=1 // loop_footer_branch
      %20 = sbr.rel target = $region3
    $region8: #{tpu_custom_call.1} parent=1 // loop_exit
      _
    %2932 = vsyncpa [#allocation4], 1
    %s2933 = scalar_lea.sflag [#allocation4], 1
    %2934 = vsyncpa %s2933, 1
    %2935 = vsyncpa [#allocation7], 1
    %2936 = vsyncpa [#allocation10], 1
    %2937 = vsyncpa [#allocation5], 1
    %s2938 = scalar_lea.sflag [#allocation5], 1
    %2939 = vsyncpa %s2938, 1

</llo_original>
